<compile_context>
chip_gen: v7x
topology: tpu7x:2x2x1
jax: 0.10.0
libtpu: 0.0.40
codegen_flags: <defaults>
</compile_context>

<pallas_src>
import jax
import jax.numpy as jnp
from jax.experimental import pallas as pl
from jax.experimental.pallas import tpu as pltpu


def _res_block_kernel(x_ref, mask_ref, ws_ref, bs_ref, w0_ref, b0_ref,
                      w1_ref, b1_ref, o_ref, buf_ref, cols_ref, colr_ref):
    # x_ref    : (Cin_p, L)        halo-extended, zero-padded, flattened image
    #                              (channels on sublanes, flat spatial on lanes)
    # mask_ref : (1, HWp)          1.0 at interior pixels of the padded image
    # w*_ref   : (Cout_p, 9*Ci_p)  3x3 weights, flattened K = tap-major then ci
    # b*_ref   : (Cout_p, 1)
    # o_ref    : (Cout_p, HWp)     flattened padded-image-sized output
    # buf_ref  : (Cout_p, L)       VMEM scratch, halo-extended intermediate
    # cols_ref : (9*Cin_p, HWp)    im2col scratch for the skip conv
    # colr_ref : (9*Cout_p, HWp)   im2col scratch for conv_0 / conv_1
    _, L = x_ref.shape
    _, HWp = o_ref.shape
    P = (L - HWp) // 2            # halo width in flat positions (= Wp + 1)
    Wp = P - 1
    # flat-position offset of each 3x3 tap (t = ky*3 + kx)
    offs = [(ky - 1) * Wp + (kx - 1) for ky in range(3) for kx in range(3)]

    def conv3x3(src, col_ref, w_ref, b_ref):
        # src: (C, L) halo-extended value.  Stage the 9 shifted views into the
        # im2col scratch, then a single K = 9*C matmul on the MXU.
        C = src.shape[0]
        for t, d in enumerate(offs):
            col_ref[t * C:(t + 1) * C, :] = src[:, P + d:P + d + HWp]
        return jnp.dot(w_ref[...], col_ref[...],
                       preferred_element_type=jnp.float32) + b_ref[...]

    mask = mask_ref[...]                                   # (1, HWp), f32

    # Zero only the 2*P halo lanes of the intermediate buffer; the interior
    # [P, P+HWp) is fully overwritten before every conv that reads it.
    halo = jnp.zeros((buf_ref.shape[0], P), buf_ref.dtype)
    buf_ref[:, :P] = halo
    buf_ref[:, P + HWp:] = halo

    # activated skip op: ReLU(conv_s(x)).  The mask zeroes the padded-border
    # positions -- required, they act as zero padding for the next conv.
    skip = jnp.maximum(conv3x3(x_ref[...], cols_ref, ws_ref, bs_ref),
                       0.0) * mask

    # conv_0 + inner ReLU
    buf_ref[:, P:P + HWp] = skip.astype(buf_ref.dtype)
    r = jnp.maximum(conv3x3(buf_ref[...], colr_ref, w0_ref, b0_ref),
                    0.0) * mask

    # conv_1 (no activation before the residual add)
    buf_ref[:, P:P + HWp] = r.astype(buf_ref.dtype)
    r = conv3x3(buf_ref[...], colr_ref, w1_ref, b1_ref)

    # residual add + final ReLU.  No mask here: the wrapper slices away the
    # padded border, so border garbage is never observed.
    o_ref[...] = jnp.maximum(skip + r, 0.0).astype(o_ref.dtype)


def _round_up(x, m):
    return (x + m - 1) // m * m


def res_block_forward(x_nchw, params, use_bf16_matmul=False):
    """x_nchw: (N, Cin, H, W) float32 -> (N, Cout, H, W) float32.

    params = (ws, bs, w0, b0, w1, b1) with w*: (9, Ci, Co) tap-major 3x3
    weights and b*: (Co,) biases.
    """
    ws, bs, w0, b0, w1, b1 = params
    N, Cin, H, W = x_nchw.shape
    Cout = ws.shape[-1]
    Hp, Wp = H + 2, W + 2
    HWp = Hp * Wp
    P = Wp + 1                     # halo positions on each end of the flat image
    L = HWp + 2 * P

    # bf16 operands (f32 accumulation) -- worthwhile on v6e/v7x at real channel
    # counts; loosen the test tolerance if enabled.
    cdt = jnp.bfloat16 if use_bf16_matmul else jnp.float32

    # Pad channel counts to multiples of 8 so every sublane slice in the kernel
    # is tile-aligned (the extra channels are zero and sliced off at the end).
    Cin_p = _round_up(Cin, 8)
    Cout_p = _round_up(Cout, 8)

    def pad_axis(a, axis, size):
        pad = [(0, 0)] * a.ndim
        pad[axis] = (0, size - a.shape[axis])
        return jnp.pad(a, pad)

    # Input: channels on sublanes; zero-padded, flattened spatial (+halo) on
    # lanes.  Trailing dim L >= 128 -> wide, lane-dense DMA rows.
    xpad = jnp.pad(x_nchw, ((0, 0), (0, 0), (1, 1), (1, 1)))   # (N,Cin,Hp,Wp)
    xflat = xpad.reshape(N, Cin, HWp)
    xflat = jnp.pad(xflat, ((0, 0), (0, Cin_p - Cin), (P, P))).astype(cdt)

    # Weights: pad channels, flatten K tap-major-then-ci to match the im2col.
    ws_p = pad_axis(pad_axis(ws, 1, Cin_p), 2, Cout_p)         # (9,Cin_p,Cout_p)
    w0_p = pad_axis(pad_axis(w0, 1, Cout_p), 2, Cout_p)
    w1_p = pad_axis(pad_axis(w1, 1, Cout_p), 2, Cout_p)

    def flat_w(w):   # (9, Ci, Co) -> (Co, 9*Ci)
        return jnp.transpose(w, (2, 0, 1)).reshape(w.shape[2], 9 * w.shape[1])

    ws_f = flat_w(ws_p).astype(cdt)
    w0_f = flat_w(w0_p).astype(cdt)
    w1_f = flat_w(w1_p).astype(cdt)
    bs_c = pad_axis(bs, 0, Cout_p).reshape(Cout_p, 1)
    b0_c = pad_axis(b0, 0, Cout_p).reshape(Cout_p, 1)
    b1_c = pad_axis(b1, 0, Cout_p).reshape(Cout_p, 1)

    # Interior-pixel mask over the zero-padded (Hp, Wp) image.
    mask = jnp.zeros((Hp, Wp), jnp.float32).at[1:H + 1, 1:W + 1].set(1.0)
    mask = mask.reshape(1, HWp)

    out_flat = pl.pallas_call(
        _res_block_kernel,
        out_shape=jax.ShapeDtypeStruct((N, Cout_p, HWp), x_nchw.dtype),
        grid_spec=pltpu.PrefetchScalarGridSpec(
            num_scalar_prefetch=0,
            grid=(N,),
            in_specs=[
                pl.BlockSpec((pl.Squeezed(), Cin_p, L), lambda n: (n, 0, 0)),
                pl.BlockSpec((1, HWp), lambda n: (0, 0)),
                pl.BlockSpec((Cout_p, 9 * Cin_p), lambda n: (0, 0)),
                pl.BlockSpec((Cout_p, 1), lambda n: (0, 0)),
                pl.BlockSpec((Cout_p, 9 * Cout_p), lambda n: (0, 0)),
                pl.BlockSpec((Cout_p, 1), lambda n: (0, 0)),
                pl.BlockSpec((Cout_p, 9 * Cout_p), lambda n: (0, 0)),
                pl.BlockSpec((Cout_p, 1), lambda n: (0, 0)),
            ],
            out_specs=pl.BlockSpec((pl.Squeezed(), Cout_p, HWp),
                                   lambda n: (n, 0, 0)),
            scratch_shapes=[
                pltpu.VMEM((Cout_p, L), cdt),           # halo-extended interm.
                pltpu.VMEM((9 * Cin_p, HWp), cdt),      # im2col, skip conv
                pltpu.VMEM((9 * Cout_p, HWp), cdt),     # im2col, conv_0/conv_1
            ],
        ),
        compiler_params=pltpu.CompilerParams(
            dimension_semantics=("parallel",)),
    )(xflat, mask, ws_f, bs_c, w0_f, b0_c, w1_f, b1_c)

    out = out_flat.reshape(N, Cout_p, Hp, Wp)[:, :Cout, 1:H + 1, 1:W + 1]
    return out


def _ref_forward(x_nchw, params):
    """Pure-JAX reference of the same forward pass (for verification)."""
    ws, bs, w0, b0, w1, b1 = params
    x = jnp.transpose(x_nchw, (0, 2, 3, 1)).astype(jnp.float32)

    def conv(x, w, b):
        w4 = w.reshape(3, 3, w.shape[-2], w.shape[-1])          # HWIO
        y = jax.lax.conv_general_dilated(
            x, w4, (1, 1), 'SAME',
            dimension_numbers=('NHWC', 'HWIO', 'NHWC'))
        return y + b.reshape(1, 1, 1, -1)

    skip = jax.nn.relu(conv(x, ws, bs))
    r = jax.nn.relu(conv(skip, w0, b0))
    r = conv(r, w1, b1)
    out = jax.nn.relu(skip + r)
    return jnp.transpose(out, (0, 3, 1, 2))


if __name__ == "__main__":
    key = jax.random.PRNGKey(0)
    N, Cin, Cout, H, W = 2, 4, 8, 16, 16
    ks = jax.random.split(key, 7)

    x = jax.random.normal(ks[0], (N, Cin, H, W), jnp.float32)

    # Deterministic synthetic parameters (3x3 convs, tap-major weight layout).
    ws = jax.random.normal(ks[1], (9, Cin, Cout), jnp.float32) / jnp.sqrt(9.0 * Cin)
    bs = 0.1 * jax.random.normal(ks[2], (Cout,), jnp.float32)
    w0 = jax.random.normal(ks[3], (9, Cout, Cout), jnp.float32) / jnp.sqrt(9.0 * Cout)
    b0 = 0.1 * jax.random.normal(ks[4], (Cout,), jnp.float32)
    w1 = jax.random.normal(ks[5], (9, Cout, Cout), jnp.float32) / jnp.sqrt(9.0 * Cout)
    b1 = 0.1 * jax.random.normal(ks[6], (Cout,), jnp.float32)
    params = (ws, bs, w0, b0, w1, b1)

    out = jax.block_until_ready(res_block_forward(x, params))
    ref = jax.block_until_ready(_ref_forward(x, params))

    assert out.shape == (N, Cout, H, W)
    assert jnp.allclose(out, ref, atol=1e-4, rtol=1e-4), \
        float(jnp.max(jnp.abs(out - ref)))
    print("KERNEL_OK")
</pallas_src>

<mosaic_0001>
module attributes {stable_mosaic.version = 11 : i64} {
  func.func @_res_block_kernel(%arg0: i32, %arg1: memref<1x8x362xf32, #tpu.memory_space<vmem>>, %arg2: memref<1x324xf32, #tpu.memory_space<vmem>>, %arg3: memref<8x72xf32, #tpu.memory_space<vmem>>, %arg4: memref<8x1xf32, #tpu.memory_space<vmem>>, %arg5: memref<8x72xf32, #tpu.memory_space<vmem>>, %arg6: memref<8x1xf32, #tpu.memory_space<vmem>>, %arg7: memref<8x72xf32, #tpu.memory_space<vmem>>, %arg8: memref<8x1xf32, #tpu.memory_space<vmem>>, %arg9: memref<1x8x324xf32, #tpu.memory_space<vmem>>, %arg10: memref<8x362xf32, #tpu.memory_space<vmem>>, %arg11: memref<72x324xf32, #tpu.memory_space<vmem>>, %arg12: memref<72x324xf32, #tpu.memory_space<vmem>>) attributes {dimension_semantics = [#tpu.dimension_semantics<parallel>], iteration_bounds = array<i64: 2>, scalar_prefetch = 0 : i64, scratch_operands = 3 : i64, tpu.core_type = #tpu.core_type<tc>, window_params = [{transform_indices = @transform_0, window_bounds = array<i64: 1, 8, 362>}, {pipeline_mode = #tpu.pipeline_mode<synchronous>, transform_indices = @transform_1, window_bounds = array<i64: 1, 324>}, {pipeline_mode = #tpu.pipeline_mode<synchronous>, transform_indices = @transform_2, window_bounds = array<i64: 8, 72>}, {pipeline_mode = #tpu.pipeline_mode<synchronous>, transform_indices = @transform_3, window_bounds = array<i64: 8, 1>}, {pipeline_mode = #tpu.pipeline_mode<synchronous>, transform_indices = @transform_4, window_bounds = array<i64: 8, 72>}, {pipeline_mode = #tpu.pipeline_mode<synchronous>, transform_indices = @transform_5, window_bounds = array<i64: 8, 1>}, {pipeline_mode = #tpu.pipeline_mode<synchronous>, transform_indices = @transform_6, window_bounds = array<i64: 8, 72>}, {pipeline_mode = #tpu.pipeline_mode<synchronous>, transform_indices = @transform_7, window_bounds = array<i64: 8, 1>}, {transform_indices = @transform_8, window_bounds = array<i64: 1, 8, 324>}]} {
    %c0 = arith.constant 0 : index
    %c0_0 = arith.constant 0 : index
    %0 = vector.load %arg2[%c0, %c0_0] : memref<1x324xf32, #tpu.memory_space<vmem>>, vector<1x324xf32>
    %cst = arith.constant 0.000000e+00 : f32
    %1 = vector.broadcast %cst : f32 to vector<8x19xf32>
    %c0_1 = arith.constant 0 : index
    %c0_2 = arith.constant 0 : index
    %2 = vector.load %arg10[%c0_1, %c0_2] : memref<8x362xf32, #tpu.memory_space<vmem>>, vector<8x19xf32>
    tpu.vector_store %arg10[%c0_1, %c0_2], %1 {strides = array<i32>} : memref<8x362xf32, #tpu.memory_space<vmem>>, vector<8x19xf32>,
    %c0_3 = arith.constant 0 : index
    %c343 = arith.constant 343 : index
    %3 = vector.load %arg10[%c0_3, %c343] : memref<8x362xf32, #tpu.memory_space<vmem>>, vector<8x19xf32>
    tpu.vector_store %arg10[%c0_3, %c343], %1 {strides = array<i32>} : memref<8x362xf32, #tpu.memory_space<vmem>>, vector<8x19xf32>,
    %c0_4 = arith.constant 0 : index
    %c0_5 = arith.constant 0 : index
    %c0_6 = arith.constant 0 : index
    %4 = vector.load %arg1[%c0_4, %c0_5, %c0_6] : memref<1x8x362xf32, #tpu.memory_space<vmem>>, vector<1x8x362xf32>
    %5 = vector.shape_cast %4 : vector<1x8x362xf32> to vector<8x362xf32>
    %6 = vector.extract_strided_slice %5 {offsets = [0, 0], sizes = [8, 324], strides = [1, 1]} : vector<8x362xf32> to vector<8x324xf32>
    %c0_7 = arith.constant 0 : index
    %c0_8 = arith.constant 0 : index
    %7 = vector.load %arg11[%c0_7, %c0_8] : memref<72x324xf32, #tpu.memory_space<vmem>>, vector<8x324xf32>
    tpu.vector_store %arg11[%c0_7, %c0_8], %6 {strides = array<i32>} : memref<72x324xf32, #tpu.memory_space<vmem>>, vector<8x324xf32>,
    %8 = vector.extract_strided_slice %5 {offsets = [0, 1], sizes = [8, 324], strides = [1, 1]} : vector<8x362xf32> to vector<8x324xf32>
    %c8 = arith.constant 8 : index
    %c0_9 = arith.constant 0 : index
    %9 = vector.load %arg11[%c8, %c0_9] : memref<72x324xf32, #tpu.memory_space<vmem>>, vector<8x324xf32>
    tpu.vector_store %arg11[%c8, %c0_9], %8 {strides = array<i32>} : memref<72x324xf32, #tpu.memory_space<vmem>>, vector<8x324xf32>,
    %10 = vector.extract_strided_slice %5 {offsets = [0, 2], sizes = [8, 324], strides = [1, 1]} : vector<8x362xf32> to vector<8x324xf32>
    %c16 = arith.constant 16 : index
    %c0_10 = arith.constant 0 : index
    %11 = vector.load %arg11[%c16, %c0_10] : memref<72x324xf32, #tpu.memory_space<vmem>>, vector<8x324xf32>
    tpu.vector_store %arg11[%c16, %c0_10], %10 {strides = array<i32>} : memref<72x324xf32, #tpu.memory_space<vmem>>, vector<8x324xf32>,
    %12 = vector.extract_strided_slice %5 {offsets = [0, 18], sizes = [8, 324], strides = [1, 1]} : vector<8x362xf32> to vector<8x324xf32>
    %c24 = arith.constant 24 : index
    %c0_11 = arith.constant 0 : index
    %13 = vector.load %arg11[%c24, %c0_11] : memref<72x324xf32, #tpu.memory_space<vmem>>, vector<8x324xf32>
    tpu.vector_store %arg11[%c24, %c0_11], %12 {strides = array<i32>} : memref<72x324xf32, #tpu.memory_space<vmem>>, vector<8x324xf32>,
    %14 = vector.extract_strided_slice %5 {offsets = [0, 19], sizes = [8, 324], strides = [1, 1]} : vector<8x362xf32> to vector<8x324xf32>
    %c32 = arith.constant 32 : index
    %c0_12 = arith.constant 0 : index
    %15 = vector.load %arg11[%c32, %c0_12] : memref<72x324xf32, #tpu.memory_space<vmem>>, vector<8x324xf32>
    tpu.vector_store %arg11[%c32, %c0_12], %14 {strides = array<i32>} : memref<72x324xf32, #tpu.memory_space<vmem>>, vector<8x324xf32>,
    %16 = vector.extract_strided_slice %5 {offsets = [0, 20], sizes = [8, 324], strides = [1, 1]} : vector<8x362xf32> to vector<8x324xf32>
    %c40 = arith.constant 40 : index
    %c0_13 = arith.constant 0 : index
    %17 = vector.load %arg11[%c40, %c0_13] : memref<72x324xf32, #tpu.memory_space<vmem>>, vector<8x324xf32>
    tpu.vector_store %arg11[%c40, %c0_13], %16 {strides = array<i32>} : memref<72x324xf32, #tpu.memory_space<vmem>>, vector<8x324xf32>,
    %18 = vector.extract_strided_slice %5 {offsets = [0, 36], sizes = [8, 324], strides = [1, 1]} : vector<8x362xf32> to vector<8x324xf32>
    %c48 = arith.constant 48 : index
    %c0_14 = arith.constant 0 : index
    %19 = vector.load %arg11[%c48, %c0_14] : memref<72x324xf32, #tpu.memory_space<vmem>>, vector<8x324xf32>
    tpu.vector_store %arg11[%c48, %c0_14], %18 {strides = array<i32>} : memref<72x324xf32, #tpu.memory_space<vmem>>, vector<8x324xf32>,
    %20 = vector.extract_strided_slice %5 {offsets = [0, 37], sizes = [8, 324], strides = [1, 1]} : vector<8x362xf32> to vector<8x324xf32>
    %c56 = arith.constant 56 : index
    %c0_15 = arith.constant 0 : index
    %21 = vector.load %arg11[%c56, %c0_15] : memref<72x324xf32, #tpu.memory_space<vmem>>, vector<8x324xf32>
    tpu.vector_store %arg11[%c56, %c0_15], %20 {strides = array<i32>} : memref<72x324xf32, #tpu.memory_space<vmem>>, vector<8x324xf32>,
    %22 = vector.extract_strided_slice %5 {offsets = [0, 38], sizes = [8, 324], strides = [1, 1]} : vector<8x362xf32> to vector<8x324xf32>
    %c64 = arith.constant 64 : index
    %c0_16 = arith.constant 0 : index
    %23 = vector.load %arg11[%c64, %c0_16] : memref<72x324xf32, #tpu.memory_space<vmem>>, vector<8x324xf32>
    tpu.vector_store %arg11[%c64, %c0_16], %22 {strides = array<i32>} : memref<72x324xf32, #tpu.memory_space<vmem>>, vector<8x324xf32>,
    %c0_17 = arith.constant 0 : index
    %c0_18 = arith.constant 0 : index
    %24 = vector.load %arg3[%c0_17, %c0_18] : memref<8x72xf32, #tpu.memory_space<vmem>>, vector<8x72xf32>
    %c0_19 = arith.constant 0 : index
    %c0_20 = arith.constant 0 : index
    %25 = vector.load %arg11[%c0_19, %c0_20] : memref<72x324xf32, #tpu.memory_space<vmem>>, vector<72x324xf32>
    %cst_21 = arith.constant dense<0.000000e+00> : vector<8x324xf32>
    %26 = tpu.matmul %24, %25, %cst_21 {dimension_numbers = #tpu.dot_dimension_numbers<[1], [0], [0], [1], [0, 0, 1, 1], [], []>} : vector<8x72xf32>, vector<72x324xf32>, vector<8x324xf32> -> vector<8x324xf32>
    %c0_22 = arith.constant 0 : index
    %c0_23 = arith.constant 0 : index
    %27 = vector.load %arg4[%c0_22, %c0_23] : memref<8x1xf32, #tpu.memory_space<vmem>>, vector<8x1xf32>
    %28 = vector.broadcast %27 : vector<8x1xf32> to vector<8x324xf32>
    %29 = arith.addf %26, %28 : vector<8x324xf32>
    %cst_24 = arith.constant 0.000000e+00 : f32
    %30 = vector.broadcast %cst_24 : f32 to vector<8x324xf32>
    %31 = arith.maximumf %29, %30 : vector<8x324xf32>
    %32 = vector.broadcast %0 : vector<1x324xf32> to vector<8x324xf32>
    %33 = arith.mulf %31, %32 : vector<8x324xf32>
    %c0_25 = arith.constant 0 : index
    %c19 = arith.constant 19 : index
    %34 = vector.load %arg10[%c0_25, %c19] : memref<8x362xf32, #tpu.memory_space<vmem>>, vector<8x324xf32>
    tpu.vector_store %arg10[%c0_25, %c19], %33 {strides = array<i32>} : memref<8x362xf32, #tpu.memory_space<vmem>>, vector<8x324xf32>,
    %c0_26 = arith.constant 0 : index
    %c0_27 = arith.constant 0 : index
    %35 = vector.load %arg10[%c0_26, %c0_27] : memref<8x362xf32, #tpu.memory_space<vmem>>, vector<8x362xf32>
    %36 = vector.extract_strided_slice %35 {offsets = [0, 0], sizes = [8, 324], strides = [1, 1]} : vector<8x362xf32> to vector<8x324xf32>
    %c0_28 = arith.constant 0 : index
    %c0_29 = arith.constant 0 : index
    %37 = vector.load %arg12[%c0_28, %c0_29] : memref<72x324xf32, #tpu.memory_space<vmem>>, vector<8x324xf32>
    tpu.vector_store %arg12[%c0_28, %c0_29], %36 {strides = array<i32>} : memref<72x324xf32, #tpu.memory_space<vmem>>, vector<8x324xf32>,
    %38 = vector.extract_strided_slice %35 {offsets = [0, 1], sizes = [8, 324], strides = [1, 1]} : vector<8x362xf32> to vector<8x324xf32>
    %c8_30 = arith.constant 8 : index
    %c0_31 = arith.constant 0 : index
    %39 = vector.load %arg12[%c8_30, %c0_31] : memref<72x324xf32, #tpu.memory_space<vmem>>, vector<8x324xf32>
    tpu.vector_store %arg12[%c8_30, %c0_31], %38 {strides = array<i32>} : memref<72x324xf32, #tpu.memory_space<vmem>>, vector<8x324xf32>,
    %40 = vector.extract_strided_slice %35 {offsets = [0, 2], sizes = [8, 324], strides = [1, 1]} : vector<8x362xf32> to vector<8x324xf32>
    %c16_32 = arith.constant 16 : index
    %c0_33 = arith.constant 0 : index
    %41 = vector.load %arg12[%c16_32, %c0_33] : memref<72x324xf32, #tpu.memory_space<vmem>>, vector<8x324xf32>
    tpu.vector_store %arg12[%c16_32, %c0_33], %40 {strides = array<i32>} : memref<72x324xf32, #tpu.memory_space<vmem>>, vector<8x324xf32>,
    %42 = vector.extract_strided_slice %35 {offsets = [0, 18], sizes = [8, 324], strides = [1, 1]} : vector<8x362xf32> to vector<8x324xf32>
    %c24_34 = arith.constant 24 : index
    %c0_35 = arith.constant 0 : index
    %43 = vector.load %arg12[%c24_34, %c0_35] : memref<72x324xf32, #tpu.memory_space<vmem>>, vector<8x324xf32>
    tpu.vector_store %arg12[%c24_34, %c0_35], %42 {strides = array<i32>} : memref<72x324xf32, #tpu.memory_space<vmem>>, vector<8x324xf32>,
    %44 = vector.extract_strided_slice %35 {offsets = [0, 19], sizes = [8, 324], strides = [1, 1]} : vector<8x362xf32> to vector<8x324xf32>
    %c32_36 = arith.constant 32 : index
    %c0_37 = arith.constant 0 : index
    %45 = vector.load %arg12[%c32_36, %c0_37] : memref<72x324xf32, #tpu.memory_space<vmem>>, vector<8x324xf32>
    tpu.vector_store %arg12[%c32_36, %c0_37], %44 {strides = array<i32>} : memref<72x324xf32, #tpu.memory_space<vmem>>, vector<8x324xf32>,
    %46 = vector.extract_strided_slice %35 {offsets = [0, 20], sizes = [8, 324], strides = [1, 1]} : vector<8x362xf32> to vector<8x324xf32>
    %c40_38 = arith.constant 40 : index
    %c0_39 = arith.constant 0 : index
    %47 = vector.load %arg12[%c40_38, %c0_39] : memref<72x324xf32, #tpu.memory_space<vmem>>, vector<8x324xf32>
    tpu.vector_store %arg12[%c40_38, %c0_39], %46 {strides = array<i32>} : memref<72x324xf32, #tpu.memory_space<vmem>>, vector<8x324xf32>,
    %48 = vector.extract_strided_slice %35 {offsets = [0, 36], sizes = [8, 324], strides = [1, 1]} : vector<8x362xf32> to vector<8x324xf32>
    %c48_40 = arith.constant 48 : index
    %c0_41 = arith.constant 0 : index
    %49 = vector.load %arg12[%c48_40, %c0_41] : memref<72x324xf32, #tpu.memory_space<vmem>>, vector<8x324xf32>
    tpu.vector_store %arg12[%c48_40, %c0_41], %48 {strides = array<i32>} : memref<72x324xf32, #tpu.memory_space<vmem>>, vector<8x324xf32>,
    %50 = vector.extract_strided_slice %35 {offsets = [0, 37], sizes = [8, 324], strides = [1, 1]} : vector<8x362xf32> to vector<8x324xf32>
    %c56_42 = arith.constant 56 : index
    %c0_43 = arith.constant 0 : index
    %51 = vector.load %arg12[%c56_42, %c0_43] : memref<72x324xf32, #tpu.memory_space<vmem>>, vector<8x324xf32>
    tpu.vector_store %arg12[%c56_42, %c0_43], %50 {strides = array<i32>} : memref<72x324xf32, #tpu.memory_space<vmem>>, vector<8x324xf32>,
    %52 = vector.extract_strided_slice %35 {offsets = [0, 38], sizes = [8, 324], strides = [1, 1]} : vector<8x362xf32> to vector<8x324xf32>
    %c64_44 = arith.constant 64 : index
    %c0_45 = arith.constant 0 : index
    %53 = vector.load %arg12[%c64_44, %c0_45] : memref<72x324xf32, #tpu.memory_space<vmem>>, vector<8x324xf32>
    tpu.vector_store %arg12[%c64_44, %c0_45], %52 {strides = array<i32>} : memref<72x324xf32, #tpu.memory_space<vmem>>, vector<8x324xf32>,
    %c0_46 = arith.constant 0 : index
    %c0_47 = arith.constant 0 : index
    %54 = vector.load %arg5[%c0_46, %c0_47] : memref<8x72xf32, #tpu.memory_space<vmem>>, vector<8x72xf32>
    %c0_48 = arith.constant 0 : index
    %c0_49 = arith.constant 0 : index
    %55 = vector.load %arg12[%c0_48, %c0_49] : memref<72x324xf32, #tpu.memory_space<vmem>>, vector<72x324xf32>
    %cst_50 = arith.constant dense<0.000000e+00> : vector<8x324xf32>
    %56 = tpu.matmul %54, %55, %cst_50 {dimension_numbers = #tpu.dot_dimension_numbers<[1], [0], [0], [1], [0, 0, 1, 1], [], []>} : vector<8x72xf32>, vector<72x324xf32>, vector<8x324xf32> -> vector<8x324xf32>
    %c0_51 = arith.constant 0 : index
    %c0_52 = arith.constant 0 : index
    %57 = vector.load %arg6[%c0_51, %c0_52] : memref<8x1xf32, #tpu.memory_space<vmem>>, vector<8x1xf32>
    %58 = vector.broadcast %57 : vector<8x1xf32> to vector<8x324xf32>
    %59 = arith.addf %56, %58 : vector<8x324xf32>
    %cst_53 = arith.constant 0.000000e+00 : f32
    %60 = vector.broadcast %cst_53 : f32 to vector<8x324xf32>
    %61 = arith.maximumf %59, %60 : vector<8x324xf32>
    %62 = vector.broadcast %0 : vector<1x324xf32> to vector<8x324xf32>
    %63 = arith.mulf %61, %62 : vector<8x324xf32>
    %c0_54 = arith.constant 0 : index
    %c19_55 = arith.constant 19 : index
    %64 = vector.load %arg10[%c0_54, %c19_55] : memref<8x362xf32, #tpu.memory_space<vmem>>, vector<8x324xf32>
    tpu.vector_store %arg10[%c0_54, %c19_55], %63 {strides = array<i32>} : memref<8x362xf32, #tpu.memory_space<vmem>>, vector<8x324xf32>,
    %c0_56 = arith.constant 0 : index
    %c0_57 = arith.constant 0 : index
    %65 = vector.load %arg10[%c0_56, %c0_57] : memref<8x362xf32, #tpu.memory_space<vmem>>, vector<8x362xf32>
    %66 = vector.extract_strided_slice %65 {offsets = [0, 0], sizes = [8, 324], strides = [1, 1]} : vector<8x362xf32> to vector<8x324xf32>
    %c0_58 = arith.constant 0 : index
    %c0_59 = arith.constant 0 : index
    %67 = vector.load %arg12[%c0_58, %c0_59] : memref<72x324xf32, #tpu.memory_space<vmem>>, vector<8x324xf32>
    tpu.vector_store %arg12[%c0_58, %c0_59], %66 {strides = array<i32>} : memref<72x324xf32, #tpu.memory_space<vmem>>, vector<8x324xf32>,
    %68 = vector.extract_strided_slice %65 {offsets = [0, 1], sizes = [8, 324], strides = [1, 1]} : vector<8x362xf32> to vector<8x324xf32>
    %c8_60 = arith.constant 8 : index
    %c0_61 = arith.constant 0 : index
    %69 = vector.load %arg12[%c8_60, %c0_61] : memref<72x324xf32, #tpu.memory_space<vmem>>, vector<8x324xf32>
    tpu.vector_store %arg12[%c8_60, %c0_61], %68 {strides = array<i32>} : memref<72x324xf32, #tpu.memory_space<vmem>>, vector<8x324xf32>,
    %70 = vector.extract_strided_slice %65 {offsets = [0, 2], sizes = [8, 324], strides = [1, 1]} : vector<8x362xf32> to vector<8x324xf32>
    %c16_62 = arith.constant 16 : index
    %c0_63 = arith.constant 0 : index
    %71 = vector.load %arg12[%c16_62, %c0_63] : memref<72x324xf32, #tpu.memory_space<vmem>>, vector<8x324xf32>
    tpu.vector_store %arg12[%c16_62, %c0_63], %70 {strides = array<i32>} : memref<72x324xf32, #tpu.memory_space<vmem>>, vector<8x324xf32>,
    %72 = vector.extract_strided_slice %65 {offsets = [0, 18], sizes = [8, 324], strides = [1, 1]} : vector<8x362xf32> to vector<8x324xf32>
    %c24_64 = arith.constant 24 : index
    %c0_65 = arith.constant 0 : index
    %73 = vector.load %arg12[%c24_64, %c0_65] : memref<72x324xf32, #tpu.memory_space<vmem>>, vector<8x324xf32>
    tpu.vector_store %arg12[%c24_64, %c0_65], %72 {strides = array<i32>} : memref<72x324xf32, #tpu.memory_space<vmem>>, vector<8x324xf32>,
    %74 = vector.extract_strided_slice %65 {offsets = [0, 19], sizes = [8, 324], strides = [1, 1]} : vector<8x362xf32> to vector<8x324xf32>
    %c32_66 = arith.constant 32 : index
    %c0_67 = arith.constant 0 : index
    %75 = vector.load %arg12[%c32_66, %c0_67] : memref<72x324xf32, #tpu.memory_space<vmem>>, vector<8x324xf32>
    tpu.vector_store %arg12[%c32_66, %c0_67], %74 {strides = array<i32>} : memref<72x324xf32, #tpu.memory_space<vmem>>, vector<8x324xf32>,
    %76 = vector.extract_strided_slice %65 {offsets = [0, 20], sizes = [8, 324], strides = [1, 1]} : vector<8x362xf32> to vector<8x324xf32>
    %c40_68 = arith.constant 40 : index
    %c0_69 = arith.constant 0 : index
    %77 = vector.load %arg12[%c40_68, %c0_69] : memref<72x324xf32, #tpu.memory_space<vmem>>, vector<8x324xf32>
    tpu.vector_store %arg12[%c40_68, %c0_69], %76 {strides = array<i32>} : memref<72x324xf32, #tpu.memory_space<vmem>>, vector<8x324xf32>,
    %78 = vector.extract_strided_slice %65 {offsets = [0, 36], sizes = [8, 324], strides = [1, 1]} : vector<8x362xf32> to vector<8x324xf32>
    %c48_70 = arith.constant 48 : index
    %c0_71 = arith.constant 0 : index
    %79 = vector.load %arg12[%c48_70, %c0_71] : memref<72x324xf32, #tpu.memory_space<vmem>>, vector<8x324xf32>
    tpu.vector_store %arg12[%c48_70, %c0_71], %78 {strides = array<i32>} : memref<72x324xf32, #tpu.memory_space<vmem>>, vector<8x324xf32>,
    %80 = vector.extract_strided_slice %65 {offsets = [0, 37], sizes = [8, 324], strides = [1, 1]} : vector<8x362xf32> to vector<8x324xf32>
    %c56_72 = arith.constant 56 : index
    %c0_73 = arith.constant 0 : index
    %81 = vector.load %arg12[%c56_72, %c0_73] : memref<72x324xf32, #tpu.memory_space<vmem>>, vector<8x324xf32>
    tpu.vector_store %arg12[%c56_72, %c0_73], %80 {strides = array<i32>} : memref<72x324xf32, #tpu.memory_space<vmem>>, vector<8x324xf32>,
    %82 = vector.extract_strided_slice %65 {offsets = [0, 38], sizes = [8, 324], strides = [1, 1]} : vector<8x362xf32> to vector<8x324xf32>
    %c64_74 = arith.constant 64 : index
    %c0_75 = arith.constant 0 : index
    %83 = vector.load %arg12[%c64_74, %c0_75] : memref<72x324xf32, #tpu.memory_space<vmem>>, vector<8x324xf32>
    tpu.vector_store %arg12[%c64_74, %c0_75], %82 {strides = array<i32>} : memref<72x324xf32, #tpu.memory_space<vmem>>, vector<8x324xf32>,
    %c0_76 = arith.constant 0 : index
    %c0_77 = arith.constant 0 : index
    %84 = vector.load %arg7[%c0_76, %c0_77] : memref<8x72xf32, #tpu.memory_space<vmem>>, vector<8x72xf32>
    %c0_78 = arith.constant 0 : index
    %c0_79 = arith.constant 0 : index
    %85 = vector.load %arg12[%c0_78, %c0_79] : memref<72x324xf32, #tpu.memory_space<vmem>>, vector<72x324xf32>
    %cst_80 = arith.constant dense<0.000000e+00> : vector<8x324xf32>
    %86 = tpu.matmul %84, %85, %cst_80 {dimension_numbers = #tpu.dot_dimension_numbers<[1], [0], [0], [1], [0, 0, 1, 1], [], []>} : vector<8x72xf32>, vector<72x324xf32>, vector<8x324xf32> -> vector<8x324xf32>
    %c0_81 = arith.constant 0 : index
    %c0_82 = arith.constant 0 : index
    %87 = vector.load %arg8[%c0_81, %c0_82] : memref<8x1xf32, #tpu.memory_space<vmem>>, vector<8x1xf32>
    %88 = vector.broadcast %87 : vector<8x1xf32> to vector<8x324xf32>
    %89 = arith.addf %86, %88 : vector<8x324xf32>
    %90 = arith.addf %33, %89 : vector<8x324xf32>
    %cst_83 = arith.constant 0.000000e+00 : f32
    %91 = vector.broadcast %cst_83 : f32 to vector<8x324xf32>
    %92 = arith.maximumf %90, %91 : vector<8x324xf32>
    %c0_84 = arith.constant 0 : index
    %c0_85 = arith.constant 0 : index
    %c0_86 = arith.constant 0 : index
    %93 = vector.load %arg9[%c0_84, %c0_85, %c0_86] : memref<1x8x324xf32, #tpu.memory_space<vmem>>, vector<1x8x324xf32>
    %94 = vector.shape_cast %93 : vector<1x8x324xf32> to vector<8x324xf32>
    %95 = vector.shape_cast %92 : vector<8x324xf32> to vector<1x8x324xf32>
    tpu.vector_store %arg9[%c0_84, %c0_85, %c0_86], %95 {strides = array<i32>} : memref<1x8x324xf32, #tpu.memory_space<vmem>>, vector<1x8x324xf32>,
    return
  }
  func.func @transform_0(%arg0: i32) -> (i32, i32, i32) {
    %c0_i32 = arith.constant 0 : i32
    %c0_i32_0 = arith.constant 0 : i32
    %c0_i32_1 = arith.constant 0 : i32
    return %arg0, %c0_i32, %c0_i32_0 : i32, i32, i32
  }
  func.func @transform_1(%arg0: i32) -> (i32, i32) {
    %c0_i32 = arith.constant 0 : i32
    %c0_i32_0 = arith.constant 0 : i32
    %c0_i32_1 = arith.constant 0 : i32
    return %c0_i32, %c0_i32_0 : i32, i32
  }
  func.func @transform_2(%arg0: i32) -> (i32, i32) {
    %c0_i32 = arith.constant 0 : i32
    %c0_i32_0 = arith.constant 0 : i32
    %c0_i32_1 = arith.constant 0 : i32
    return %c0_i32, %c0_i32_0 : i32, i32
  }
  func.func @transform_3(%arg0: i32) -> (i32, i32) {
    %c0_i32 = arith.constant 0 : i32
    %c0_i32_0 = arith.constant 0 : i32
    %c0_i32_1 = arith.constant 0 : i32
    return %c0_i32, %c0_i32_0 : i32, i32
  }
  func.func @transform_4(%arg0: i32) -> (i32, i32) {
    %c0_i32 = arith.constant 0 : i32
    %c0_i32_0 = arith.constant 0 : i32
    %c0_i32_1 = arith.constant 0 : i32
    return %c0_i32, %c0_i32_0 : i32, i32
  }
  func.func @transform_5(%arg0: i32) -> (i32, i32) {
    %c0_i32 = arith.constant 0 : i32
    %c0_i32_0 = arith.constant 0 : i32
    %c0_i32_1 = arith.constant 0 : i32
    return %c0_i32, %c0_i32_0 : i32, i32
  }
  func.func @transform_6(%arg0: i32) -> (i32, i32) {
    %c0_i32 = arith.constant 0 : i32
    %c0_i32_0 = arith.constant 0 : i32
    %c0_i32_1 = arith.constant 0 : i32
    return %c0_i32, %c0_i32_0 : i32, i32
  }
  func.func @transform_7(%arg0: i32) -> (i32, i32) {
    %c0_i32 = arith.constant 0 : i32
    %c0_i32_0 = arith.constant 0 : i32
    %c0_i32_1 = arith.constant 0 : i32
    return %c0_i32, %c0_i32_0 : i32, i32
  }
  func.func @transform_8(%arg0: i32) -> (i32, i32, i32) {
    %c0_i32 = arith.constant 0 : i32
    %c0_i32_0 = arith.constant 0 : i32
    %c0_i32_1 = arith.constant 0 : i32
    return %arg0, %c0_i32, %c0_i32_0 : i32, i32, i32
  }
}

</mosaic_0001>

<llo_original>
// kernel: tpu_custom_call.1
$region0: #{tpu_custom_call.1}
  #allocation0 [shape = 'u32[]', space=smem, size = 0x4, offset = 0x4, fixed_abs, tag = 'smem constant byte address 0x4 - core index']
  #allocation1 [shape = 'u32[144,128]{1,0:T(1,128)}', space=vmem, size = 0x12000, scoped, tag = 'internal scratch']
  #allocation2 [shape = 'f32[8,362]{1,0:T(8,128)}', space=vmem, size = 0x3000, scoped, tag = 'scratch operand']
  #allocation3 [shape = 'f32[72,324]{1,0:T(8,128)}', space=vmem, size = 0x1b000, scoped, tag = 'scratch operand']
  #allocation4 [shape = 'f32[72,324]{1,0:T(8,128)}', space=vmem, size = 0x1b000, scoped, tag = 'scratch operand']
  %s0 = inlined_call_operand.hbm [shape: f32[2,8,362], index: 0, kind: input, shape index: {}]
  %s1 = inlined_call_operand.vmem [shape: f32[1,324], index: 1, kind: input, shape index: {}]
  %s2 = inlined_call_operand.vmem [shape: f32[8,72], index: 2, kind: input, shape index: {}]
  %s3 = inlined_call_operand.vmem [shape: f32[8,1], index: 3, kind: input, shape index: {}]
  %s4 = inlined_call_operand.vmem [shape: f32[8,72], index: 4, kind: input, shape index: {}]
  %s5 = inlined_call_operand.vmem [shape: f32[8,1], index: 5, kind: input, shape index: {}]
  %s6 = inlined_call_operand.vmem [shape: f32[8,72], index: 6, kind: input, shape index: {}]
  %s7 = inlined_call_operand.vmem [shape: f32[8,1], index: 7, kind: input, shape index: {}]
  %s8 = inlined_call_operand.hbm [shape: f32[2,8,324], index: 8, kind: output, shape index: {}]
  %s9 = sld [smem:[#allocation0]]
  $region69: #{tpu_custom_call.1} parent=0
    _
  %s11 = ssub.s32 1, %s9
  %s12 = scalar_select 0, %s11, %s9
  $region1: #{tpu_custom_call.1} parent=0
    #allocation5 [shape = 'u8[24576]{0}', space=vmem, size = 0x6000, scoped, tag = 'input window, operand 0']
    #allocation6 [shape = 's32[2]{0}', space=sflag, size = 0x8, scoped, tag = 'scoped memory for tpu_custom_call.1']
    #allocation7 [shape = 's32[2]{0}', space=sflag, size = 0x8, scoped, tag = 'scoped memory for tpu_custom_call.1']
    #allocation8 [shape = 'u8[24576]{0}', space=vmem, size = 0x6000, scoped, tag = 'output window, operand 0']
    %13 = vsyncpa [#allocation6], 0
    %s14 = scalar_lea.sflag [#allocation6], 1
    %15 = vsyncpa %s14, 0
    %16 = vsyncpa [#allocation7], 0
    %s17 = scalar_lea.sflag [#allocation7], 1
    %18 = vsyncpa %s17, 0
    loop: start=0, step=1, limit=4
    $region2: #{tpu_custom_call.1} parent=1 // loop_pre_header
      _
    $region3: #{tpu_custom_call.1} parent=1 // loop_header
      %s20 = sphi 0, %s24
      %p21 = scmp.ge.s32.totalorder %s20, 4
      %s30 = sphi 0, %s32
      %s33 = sphi 0, %s30
      %s34 = sphi 0, %s33
      %s50 = sphi 0, %s34
      %s54 = sphi 0, %s54
      %s56 = sphi 0, %s54
      %s57 = sphi 0, %s56
      %s71 = sphi 0, %s57
      %s75 = sphi 0, %s75
      %s77 = sphi 0, %s75
      %s78 = sphi 0, %s77
      %s92 = sphi 0, %s78
      %s96 = sphi 0, %s96
      %s98 = sphi 0, %s96
      %s99 = sphi 0, %s98
      %s113 = sphi 0, %s99
      %s117 = sphi 0, %s117
      %s119 = sphi 0, %s117
      %s120 = sphi 0, %s119
      %s134 = sphi 0, %s120
      %s138 = sphi 0, %s138
      %s140 = sphi 0, %s138
      %s141 = sphi 0, %s140
      %s155 = sphi 0, %s141
      %s159 = sphi 0, %s159
      %s161 = sphi 0, %s159
      %s162 = sphi 0, %s161
      %s176 = sphi 0, %s162
      %s180 = sphi 0, %s180
      %s182 = sphi 0, %s180
      %s183 = sphi 0, %s182
      %s197 = sphi 0, %s183
      %s203 = sphi 0, %s205
      %s206 = sphi 0, %s203
      %s207 = sphi 0, %s206
      %s223 = sphi 0, %s207
    $region4: #{tpu_custom_call.1} parent=1 // loop_header_branch
      %23 = sbr.rel (%p21) target = $region8
    $region5: #{tpu_custom_call.1} parent=1 // loop_body
      %s25 = ssub.s32 %s20, 1
      %s26 = ssub.s32 %s20, 2
      %s27 = sadd.s32 %s20, 1
      %s28 = ssub.s32 %s20, %s27
      %p29 = scmp.eq.s32.totalorder %s28, 0
      %s31 = sadd.s32 %s30, 1
      %s32 = scalar_select %p29, %s30, %s31
      %p35 = pneg %p29
      %p36 = scmp.eq.s32.totalorder %s20, 1
      %p37 = por %p35, %p36
      %p38 = scmp.ne.s32.totalorder %s30, %s33
      %p39 = scmp.eq.s32.totalorder %s20, 0
      %p40 = por %p38, %p39
      %p41 = scmp.ne.s32.totalorder %s30, %s33
      %p42 = scmp.eq.s32.totalorder %s25, 1
      %p43 = por %p41, %p42
      %p44 = scmp.ne.s32.totalorder %s33, %s34
      %p45 = scmp.eq.s32.totalorder %s25, 0
      %p46 = por %p44, %p45
      %p47 = scmp.ne.s32.totalorder %s33, %s34
      %p48 = scmp.eq.s32.totalorder %s26, 1
      %p49 = por %p47, %p48
      %p51 = scmp.ne.s32.totalorder %s34, %s50
      %p52 = scmp.eq.s32.totalorder %s26, 0
      %p53 = por %p51, %p52
      %s55 = sadd.s32 %s54, 1
      %p58 = scmp.eq.s32.totalorder %s20, 1
      %p59 = scmp.ne.s32.totalorder %s54, %s56
      %p60 = scmp.eq.s32.totalorder %s20, 0
      %p61 = por %p59, %p60
      %p62 = scmp.ne.s32.totalorder %s54, %s56
      %p63 = scmp.eq.s32.totalorder %s25, 1
      %p64 = por %p62, %p63
      %p65 = scmp.ne.s32.totalorder %s56, %s57
      %p66 = scmp.eq.s32.totalorder %s25, 0
      %p67 = por %p65, %p66
      %p68 = scmp.ne.s32.totalorder %s56, %s57
      %p69 = scmp.eq.s32.totalorder %s26, 1
      %p70 = por %p68, %p69
      %p72 = scmp.ne.s32.totalorder %s57, %s71
      %p73 = scmp.eq.s32.totalorder %s26, 0
      %p74 = por %p72, %p73
      %s76 = sadd.s32 %s75, 1
      %p79 = scmp.eq.s32.totalorder %s20, 1
      %p80 = scmp.ne.s32.totalorder %s75, %s77
      %p81 = scmp.eq.s32.totalorder %s20, 0
      %p82 = por %p80, %p81
      %p83 = scmp.ne.s32.totalorder %s75, %s77
      %p84 = scmp.eq.s32.totalorder %s25, 1
      %p85 = por %p83, %p84
      %p86 = scmp.ne.s32.totalorder %s77, %s78
      %p87 = scmp.eq.s32.totalorder %s25, 0
      %p88 = por %p86, %p87
      %p89 = scmp.ne.s32.totalorder %s77, %s78
      %p90 = scmp.eq.s32.totalorder %s26, 1
      %p91 = por %p89, %p90
      %p93 = scmp.ne.s32.totalorder %s78, %s92
      %p94 = scmp.eq.s32.totalorder %s26, 0
      %p95 = por %p93, %p94
      %s97 = sadd.s32 %s96, 1
      %p100 = scmp.eq.s32.totalorder %s20, 1
      %p101 = scmp.ne.s32.totalorder %s96, %s98
      %p102 = scmp.eq.s32.totalorder %s20, 0
      %p103 = por %p101, %p102
      %p104 = scmp.ne.s32.totalorder %s96, %s98
      %p105 = scmp.eq.s32.totalorder %s25, 1
      %p106 = por %p104, %p105
      %p107 = scmp.ne.s32.totalorder %s98, %s99
      %p108 = scmp.eq.s32.totalorder %s25, 0
      %p109 = por %p107, %p108
      %p110 = scmp.ne.s32.totalorder %s98, %s99
      %p111 = scmp.eq.s32.totalorder %s26, 1
      %p112 = por %p110, %p111
      %p114 = scmp.ne.s32.totalorder %s99, %s113
      %p115 = scmp.eq.s32.totalorder %s26, 0
      %p116 = por %p114, %p115
      %s118 = sadd.s32 %s117, 1
      %p121 = scmp.eq.s32.totalorder %s20, 1
      %p122 = scmp.ne.s32.totalorder %s117, %s119
      %p123 = scmp.eq.s32.totalorder %s20, 0
      %p124 = por %p122, %p123
      %p125 = scmp.ne.s32.totalorder %s117, %s119
      %p126 = scmp.eq.s32.totalorder %s25, 1
      %p127 = por %p125, %p126
      %p128 = scmp.ne.s32.totalorder %s119, %s120
      %p129 = scmp.eq.s32.totalorder %s25, 0
      %p130 = por %p128, %p129
      %p131 = scmp.ne.s32.totalorder %s119, %s120
      %p132 = scmp.eq.s32.totalorder %s26, 1
      %p133 = por %p131, %p132
      %p135 = scmp.ne.s32.totalorder %s120, %s134
      %p136 = scmp.eq.s32.totalorder %s26, 0
      %p137 = por %p135, %p136
      %s139 = sadd.s32 %s138, 1
      %p142 = scmp.eq.s32.totalorder %s20, 1
      %p143 = scmp.ne.s32.totalorder %s138, %s140
      %p144 = scmp.eq.s32.totalorder %s20, 0
      %p145 = por %p143, %p144
      %p146 = scmp.ne.s32.totalorder %s138, %s140
      %p147 = scmp.eq.s32.totalorder %s25, 1
      %p148 = por %p146, %p147
      %p149 = scmp.ne.s32.totalorder %s140, %s141
      %p150 = scmp.eq.s32.totalorder %s25, 0
      %p151 = por %p149, %p150
      %p152 = scmp.ne.s32.totalorder %s140, %s141
      %p153 = scmp.eq.s32.totalorder %s26, 1
      %p154 = por %p152, %p153
      %p156 = scmp.ne.s32.totalorder %s141, %s155
      %p157 = scmp.eq.s32.totalorder %s26, 0
      %p158 = por %p156, %p157
      %s160 = sadd.s32 %s159, 1
      %p163 = scmp.eq.s32.totalorder %s20, 1
      %p164 = scmp.ne.s32.totalorder %s159, %s161
      %p165 = scmp.eq.s32.totalorder %s20, 0
      %p166 = por %p164, %p165
      %p167 = scmp.ne.s32.totalorder %s159, %s161
      %p168 = scmp.eq.s32.totalorder %s25, 1
      %p169 = por %p167, %p168
      %p170 = scmp.ne.s32.totalorder %s161, %s162
      %p171 = scmp.eq.s32.totalorder %s25, 0
      %p172 = por %p170, %p171
      %p173 = scmp.ne.s32.totalorder %s161, %s162
      %p174 = scmp.eq.s32.totalorder %s26, 1
      %p175 = por %p173, %p174
      %p177 = scmp.ne.s32.totalorder %s162, %s176
      %p178 = scmp.eq.s32.totalorder %s26, 0
      %p179 = por %p177, %p178
      %s181 = sadd.s32 %s180, 1
      %p184 = scmp.eq.s32.totalorder %s20, 1
      %p185 = scmp.ne.s32.totalorder %s180, %s182
      %p186 = scmp.eq.s32.totalorder %s20, 0
      %p187 = por %p185, %p186
      %p188 = scmp.ne.s32.totalorder %s180, %s182
      %p189 = scmp.eq.s32.totalorder %s25, 1
      %p190 = por %p188, %p189
      %p191 = scmp.ne.s32.totalorder %s182, %s183
      %p192 = scmp.eq.s32.totalorder %s25, 0
      %p193 = por %p191, %p192
      %p194 = scmp.ne.s32.totalorder %s182, %s183
      %p195 = scmp.eq.s32.totalorder %s26, 1
      %p196 = por %p194, %p195
      %p198 = scmp.ne.s32.totalorder %s183, %s197
      %p199 = scmp.eq.s32.totalorder %s26, 0
      %p200 = por %p198, %p199
      %s201 = ssub.s32 %s20, %s27
      %p202 = scmp.eq.s32.totalorder %s201, 0
      %s204 = sadd.s32 %s203, 1
      %s205 = scalar_select %p202, %s203, %s204
      %p208 = pneg %p202
      %p209 = scmp.eq.s32.totalorder %s20, 1
      %p210 = por %p208, %p209
      %p211 = scmp.ne.s32.totalorder %s203, %s206
      %p212 = scmp.eq.s32.totalorder %s20, 0
      %p213 = por %p211, %p212
      %p214 = scmp.ne.s32.totalorder %s203, %s206
      %p215 = scmp.eq.s32.totalorder %s25, 1
      %p216 = por %p214, %p215
      %p217 = scmp.ne.s32.totalorder %s206, %s207
      %p218 = scmp.eq.s32.totalorder %s25, 0
      %p219 = por %p217, %p218
      %p220 = scmp.ne.s32.totalorder %s206, %s207
      %p221 = scmp.eq.s32.totalorder %s26, 1
      %p222 = por %p220, %p221
      %p224 = scmp.ne.s32.totalorder %s207, %s223
      %p225 = scmp.eq.s32.totalorder %s26, 0
      %p226 = por %p224, %p225
      %p227 = scmp.le.s32.totalorder 1, %s20
      %p228 = scmp.lt.s32.totalorder %s20, 3
      %p229 = pnand %p227, %p228
      %p230 = pneg %p229
      // Predicated region
      $region9: #{tpu_custom_call.1} parent=5 // pred_check
        _
      $region10: #{tpu_custom_call.1} parent=5 // pred_check_branch
        %232 = sbr.rel (%p229) target = $region12
      $region11: #{tpu_custom_call.1} parent=5 // pred_region
        %s233 = ssub.s32 %s20, 1
        // Predicated region
        $region13: #{tpu_custom_call.1} parent=11 // pred_check
          %p234 = pneg %p67
        $region14: #{tpu_custom_call.1} parent=11 // pred_check_branch
          %236 = sbr.rel (%p234) target = $region16
        $region15: #{tpu_custom_call.1} parent=11 // pred_region
          _
        $region16: #{tpu_custom_call.1} parent=11 // pred_fallthru
          _
        // Predicated region
        $region17: #{tpu_custom_call.1} parent=11 // pred_check
          %p237 = pneg %p88
        $region18: #{tpu_custom_call.1} parent=11 // pred_check_branch
          %239 = sbr.rel (%p237) target = $region20
        $region19: #{tpu_custom_call.1} parent=11 // pred_region
          _
        $region20: #{tpu_custom_call.1} parent=11 // pred_fallthru
          _
        // Predicated region
        $region21: #{tpu_custom_call.1} parent=11 // pred_check
          %p240 = pneg %p109
        $region22: #{tpu_custom_call.1} parent=11 // pred_check_branch
          %242 = sbr.rel (%p240) target = $region24
        $region23: #{tpu_custom_call.1} parent=11 // pred_region
          _
        $region24: #{tpu_custom_call.1} parent=11 // pred_fallthru
          _
        // Predicated region
        $region25: #{tpu_custom_call.1} parent=11 // pred_check
          %p243 = pneg %p130
        $region26: #{tpu_custom_call.1} parent=11 // pred_check_branch
          %245 = sbr.rel (%p243) target = $region28
        $region27: #{tpu_custom_call.1} parent=11 // pred_region
          _
        $region28: #{tpu_custom_call.1} parent=11 // pred_fallthru
          _
        // Predicated region
        $region29: #{tpu_custom_call.1} parent=11 // pred_check
          %p246 = pneg %p151
        $region30: #{tpu_custom_call.1} parent=11 // pred_check_branch
          %248 = sbr.rel (%p246) target = $region32
        $region31: #{tpu_custom_call.1} parent=11 // pred_region
          _
        $region32: #{tpu_custom_call.1} parent=11 // pred_fallthru
          _
        // Predicated region
        $region33: #{tpu_custom_call.1} parent=11 // pred_check
          %p249 = pneg %p172
        $region34: #{tpu_custom_call.1} parent=11 // pred_check_branch
          %251 = sbr.rel (%p249) target = $region36
        $region35: #{tpu_custom_call.1} parent=11 // pred_region
          _
        $region36: #{tpu_custom_call.1} parent=11 // pred_fallthru
          _
        // Predicated region
        $region37: #{tpu_custom_call.1} parent=11 // pred_check
          %p252 = pneg %p193
        $region38: #{tpu_custom_call.1} parent=11 // pred_check_branch
          %254 = sbr.rel (%p252) target = $region40
        $region39: #{tpu_custom_call.1} parent=11 // pred_region
          _
        $region40: #{tpu_custom_call.1} parent=11 // pred_fallthru
          _
      $region12: #{tpu_custom_call.1} parent=5 // pred_fallthru
        _
      %p255 = scmp.lt.s32.totalorder %s20, 2
      // Predicated region
      $region41: #{tpu_custom_call.1} parent=5 // pred_check
        %p256 = pneg %p255
      $region42: #{tpu_custom_call.1} parent=5 // pred_check_branch
        %258 = sbr.rel (%p256) target = $region44
      $region43: #{tpu_custom_call.1} parent=5 // pred_region
        // Predicated region
        $region45: #{tpu_custom_call.1} parent=43 // pred_check
          %p259 = pneg %p40
        $region46: #{tpu_custom_call.1} parent=43 // pred_check_branch
          %261 = sbr.rel (%p259) target = $region48
        $region47: #{tpu_custom_call.1} parent=43 // pred_region
          %s262 = sand.u32 %s30, 1
          %s263 = scalar_lea.sflag [#allocation6], %s262
          %s264 = sand.u32 %s30, 1
          %s265 = smul.addr %s264, 24
          %s266 = scalar_lea.vmem [#allocation5], %s265
          %s268 = ssub.s32 384, 384
          %269 = vsyncadd %s263, %s268
          %s270 = smul.addr %s20, 3
          %s271 = smul.addr %s270, 128
          %s272 = scalar_lea.hbm %s0, %s271
          %s274 = sshll.u32 %s266, 4
          %s275 = int_to_ptr.vmem [resolvable:$true] %s274
          %277 = dma.hbm_to_vmem [thread:$0]  %s272, 384, %s275, %s263
        $region48: #{tpu_custom_call.1} parent=43 // pred_fallthru
          _
      $region44: #{tpu_custom_call.1} parent=5 // pred_fallthru
        _
      %p278 = scmp.le.s32.totalorder 1, %s20
      %p279 = scmp.lt.s32.totalorder %s20, 3
      %p280 = pnand %p278, %p279
      %p281 = pneg %p280
      // Predicated region
      $region49: #{tpu_custom_call.1} parent=5 // pred_check
        _
      $region50: #{tpu_custom_call.1} parent=5 // pred_check_branch
        %283 = sbr.rel (%p280) target = $region52
      $region51: #{tpu_custom_call.1} parent=5 // pred_region
        %s284 = ssub.s32 %s20, 1
        %s285 = sand.u32 %s33, 1
        %s286 = scalar_lea.sflag [#allocation6], %s285
        %s287 = sand.u32 %s33, 1
        %s288 = smul.addr %s287, 24
        %s289 = scalar_lea.vmem [#allocation5], %s288
        // Predicated region
        $region53: #{tpu_custom_call.1} parent=51 // pred_check
          %p290 = pneg %p46
        $region54: #{tpu_custom_call.1} parent=51 // pred_check_branch
          %292 = sbr.rel (%p290) target = $region56
        $region55: #{tpu_custom_call.1} parent=51 // pred_region
          %293 = dma.done %s286, 384
        $region56: #{tpu_custom_call.1} parent=51 // pred_fallthru
          _
        %s294 = sand.u32 %s33, 1
        %s295 = scalar_lea.sflag [#allocation6], %s294
        %s296 = sand.u32 %s33, 1
        %s297 = smul.addr %s296, 24
        %s298 = scalar_lea.vmem [#allocation5], %s297
        %p299 = pneg %p46
        %p300 = pneg %p43
        %p301 = pneg %p67
        %p302 = pneg %p64
        %p303 = pneg %p88
        %p304 = pneg %p85
        %p305 = pneg %p109
        %p306 = pneg %p106
        %p307 = pneg %p130
        %p308 = pneg %p127
        %p309 = pneg %p151
        %p310 = pneg %p148
        %p311 = pneg %p172
        %p312 = pneg %p169
        %p313 = pneg %p193
        %p314 = pneg %p190
        %p315 = pneg %p219
        %p316 = pneg %p216
        %s317 = sand.u32 %s206, 1
        %s318 = scalar_lea.sflag [#allocation7], %s317
        %s319 = sand.u32 %s206, 1
        %s320 = smul.addr %s319, 24
        %s321 = scalar_lea.vmem [#allocation8], %s320
        %v322 = vld [vmem:[%s1] sm:$0x7]
        %vm323 = vcmask 154624
        %324 = vst.msk [vmem:[#allocation2] sm:$0xff] %vm323, 0.0
        %vm325 = vcmask 868024
        %326 = vst.msk [vmem:[#allocation2 + $0x10] sm:$0xff] %vm325, 0.0
        %v327 = vld [vmem:[%s289] sm:$0xff]
        %v328 = vld [vmem:[%s289 + $0x8] sm:$0xff]
        %v329 = vld [vmem:[%s289 + $0x10] sm:$0xff]
        %330 = vst [vmem:[#allocation3] sm:$0xff] %v327
        %331 = vst [vmem:[#allocation3 + $0x8] sm:$0xff] %v328
        %vm332 = vcmask 556032
        %333 = vst.msk [vmem:[#allocation3 + $0x10] sm:$0xff] %vm332, %v329
        %337 = vrot.lane.b32.xlu0 %v327, 127
        %v338 = vpop.permute.xlu0 %337
        %339 = vrot.lane.b32.xlu0 %v328, 127
        %v340 = vpop.permute.xlu0 %339
        %341 = vrot.lane.b32.xlu0 %v329, 127
        %v342 = vpop.permute.xlu0 %341
        %vm343 = vcmask 1039360
        %v344 = vsel %vm343, %v338, %v340
        %v345 = vsel %vm343, %v340, %v342
        %349 = vst [vmem:[#allocation3 + $0x18] sm:$0xff] %v344
        %350 = vst [vmem:[#allocation3 + $0x20] sm:$0xff] %v345
        %351 = vst.msk [vmem:[#allocation3 + $0x28] sm:$0xff] %vm332, %v342
        %352 = vrot.lane.b32.xlu0 %v327, 126
        %v353 = vpop.permute.xlu0 %352
        %354 = vrot.lane.b32.xlu0 %v328, 126
        %v355 = vpop.permute.xlu0 %354
        %356 = vrot.lane.b32.xlu0 %v329, 126
        %v357 = vpop.permute.xlu0 %356
        %vm358 = vcmask 1031168
        %v359 = vsel %vm358, %v353, %v355
        %v360 = vsel %vm358, %v355, %v357
        %364 = vst [vmem:[#allocation3 + $0x30] sm:$0xff] %v359
        %365 = vst [vmem:[#allocation3 + $0x38] sm:$0xff] %v360
        %366 = vst.msk [vmem:[#allocation3 + $0x40] sm:$0xff] %vm332, %v357
        %367 = vrot.lane.b32.xlu0 %v327, 110
        %v368 = vpop.permute.xlu0 %367
        %369 = vrot.lane.b32.xlu0 %v328, 110
        %v370 = vpop.permute.xlu0 %369
        %371 = vrot.lane.b32.xlu0 %v329, 110
        %v372 = vpop.permute.xlu0 %371
        %vm373 = vcmask 900096
        %v374 = vsel %vm373, %v368, %v370
        %v375 = vsel %vm373, %v370, %v372
        %379 = vst [vmem:[#allocation3 + $0x48] sm:$0xff] %v374
        %380 = vst [vmem:[#allocation3 + $0x50] sm:$0xff] %v375
        %381 = vst.msk [vmem:[#allocation3 + $0x58] sm:$0xff] %vm332, %v372
        %382 = vrot.lane.b32.xlu0 %v327, 109
        %v383 = vpop.permute.xlu0 %382
        %384 = vrot.lane.b32.xlu0 %v328, 109
        %v385 = vpop.permute.xlu0 %384
        %386 = vrot.lane.b32.xlu0 %v329, 109
        %v387 = vpop.permute.xlu0 %386
        %vm388 = vcmask 891904
        %v389 = vsel %vm388, %v383, %v385
        %v390 = vsel %vm388, %v385, %v387
        %394 = vst [vmem:[#allocation3 + $0x60] sm:$0xff] %v389
        %395 = vst [vmem:[#allocation3 + $0x68] sm:$0xff] %v390
        %396 = vst.msk [vmem:[#allocation3 + $0x70] sm:$0xff] %vm332, %v387
        %397 = vrot.lane.b32.xlu0 %v327, 108
        %v398 = vpop.permute.xlu0 %397
        %399 = vrot.lane.b32.xlu0 %v328, 108
        %v400 = vpop.permute.xlu0 %399
        %401 = vrot.lane.b32.xlu0 %v329, 108
        %v402 = vpop.permute.xlu0 %401
        %vm403 = vcmask 883712
        %v404 = vsel %vm403, %v398, %v400
        %v405 = vsel %vm403, %v400, %v402
        %409 = vst [vmem:[#allocation3 + $0x78] sm:$0xff] %v404
        %410 = vst [vmem:[#allocation3 + $0x80] sm:$0xff] %v405
        %411 = vst.msk [vmem:[#allocation3 + $0x88] sm:$0xff] %vm332, %v402
        %412 = vrot.lane.b32.xlu0 %v327, 92
        %v413 = vpop.permute.xlu0 %412
        %414 = vrot.lane.b32.xlu0 %v328, 92
        %v415 = vpop.permute.xlu0 %414
        %416 = vrot.lane.b32.xlu0 %v329, 92
        %v417 = vpop.permute.xlu0 %416
        %vm418 = vcmask 752640
        %v419 = vsel %vm418, %v413, %v415
        %v420 = vsel %vm418, %v415, %v417
        %424 = vst [vmem:[#allocation3 + $0x90] sm:$0xff] %v419
        %425 = vst [vmem:[#allocation3 + $0x98] sm:$0xff] %v420
        %426 = vst.msk [vmem:[#allocation3 + $0xa0] sm:$0xff] %vm332, %v417
        %427 = vrot.lane.b32.xlu0 %v327, 91
        %v428 = vpop.permute.xlu0 %427
        %429 = vrot.lane.b32.xlu0 %v328, 91
        %v430 = vpop.permute.xlu0 %429
        %431 = vrot.lane.b32.xlu0 %v329, 91
        %v432 = vpop.permute.xlu0 %431
        %vm433 = vcmask 744448
        %v434 = vsel %vm433, %v428, %v430
        %v435 = vsel %vm433, %v430, %v432
        %439 = vst [vmem:[#allocation3 + $0xa8] sm:$0xff] %v434
        %440 = vst [vmem:[#allocation3 + $0xb0] sm:$0xff] %v435
        %441 = vst.msk [vmem:[#allocation3 + $0xb8] sm:$0xff] %vm332, %v432
        %442 = vrot.lane.b32.xlu0 %v327, 90
        %v443 = vpop.permute.xlu0 %442
        %444 = vrot.lane.b32.xlu0 %v328, 90
        %v445 = vpop.permute.xlu0 %444
        %446 = vrot.lane.b32.xlu0 %v329, 90
        %v447 = vpop.permute.xlu0 %446
        %vm448 = vcmask 736256
        %v449 = vsel %vm448, %v443, %v445
        %v450 = vsel %vm448, %v445, %v447
        %454 = vst [vmem:[#allocation3 + $0xc0] sm:$0xff] %v449
        %455 = vst [vmem:[#allocation3 + $0xc8] sm:$0xff] %v450
        %456 = vst.msk [vmem:[#allocation3 + $0xd0] sm:$0xff] %vm332, %v447
        %v457 = vld [vmem:[%s2] sm:$0xff]
        %v458 = vld [vmem:[#allocation3] sm:$0xff]
        %v459 = vld [vmem:[#allocation3 + $0x8] sm:$0xff]
        %v460 = vld [vmem:[#allocation3 + $0x10] sm:$0xff]
        %v461 = vld [vmem:[#allocation3 + $0x18] sm:$0xff]
        %v462 = vld [vmem:[#allocation3 + $0x20] sm:$0xff]
        %v463 = vld [vmem:[#allocation3 + $0x28] sm:$0xff]
        %v464 = vld [vmem:[#allocation3 + $0x30] sm:$0xff]
        %v465 = vld [vmem:[#allocation3 + $0x38] sm:$0xff]
        %v466 = vld [vmem:[#allocation3 + $0x40] sm:$0xff]
        %v467 = vld [vmem:[#allocation3 + $0x48] sm:$0xff]
        %v468 = vld [vmem:[#allocation3 + $0x50] sm:$0xff]
        %v469 = vld [vmem:[#allocation3 + $0x58] sm:$0xff]
        %v470 = vld [vmem:[#allocation3 + $0x60] sm:$0xff]
        %v471 = vld [vmem:[#allocation3 + $0x68] sm:$0xff]
        %v472 = vld [vmem:[#allocation3 + $0x70] sm:$0xff]
        %v473 = vld [vmem:[#allocation3 + $0x78] sm:$0xff]
        %v474 = vld [vmem:[#allocation3 + $0x80] sm:$0xff]
        %v475 = vld [vmem:[#allocation3 + $0x88] sm:$0xff]
        %v476 = vld [vmem:[#allocation3 + $0x90] sm:$0xff]
        %v477 = vld [vmem:[#allocation3 + $0x98] sm:$0xff]
        %v478 = vld [vmem:[#allocation3 + $0xa0] sm:$0xff]
        %v479 = vld [vmem:[#allocation3 + $0xa8] sm:$0xff]
        %v480 = vld [vmem:[#allocation3 + $0xb0] sm:$0xff]
        %v481 = vld [vmem:[#allocation3 + $0xb8] sm:$0xff]
        %v482 = vld [vmem:[#allocation3 + $0xc0] sm:$0xff]
        %v483 = vld [vmem:[#allocation3 + $0xc8] sm:$0xff]
        %v484 = vld [vmem:[#allocation3 + $0xd0] sm:$0xff]
        %v485 = vld [vmem:[%s3] sm:$0xff]
        %487 = vset.pattern.permute.xlu0 0
        %488 = vperm.xlu0 %487, %v485
        %v489 = vpop.permute.xlu0 %488
        %vm491 = vcmask 588800
        %v493 = vsel %vm491, %v457, 0
        %495 = vmatprep.subr.mxu0 %v459
        %496 = vmatpush1.msra.mxu0 %v458
        %497 = vmatprep.subr.mxu0 %v462
        %498 = vmatpush1.msra.mxu0 %v461
        %499 = vmatprep.subr.mxu0 %v465
        %500 = vmatpush1.msra.mxu0 %v464
        %501 = vmatprep.subr.mxu0 %v468
        %502 = vmatpush1.msra.mxu0 %v467
        %503 = vmatprep.subr.mxu0 %v471
        %504 = vmatpush1.msra.mxu0 %v470
        %505 = vmatprep.subr.mxu0 %v474
        %506 = vmatpush1.msra.mxu0 %v473
        %507 = vmatprep.subr.mxu0 %v477
        %508 = vmatpush1.msra.mxu0 %v476
        %509 = vmatprep.subr.mxu0 %v480
        %510 = vmatpush1.msra.mxu0 %v479
        %511 = vmatprep.subr.mxu0 %v483
        %512 = vmatpush1.msra.mxu0 %v482
        %513 = vmatprep.subr.mxu0 0.0
        %514 = vmatpush1.msra.mxu0 0.0
        %515 = vmatprep.subr.mxu0 0.0
        %516 = vmatpush1.msra.mxu0 0.0
        %517 = vmatprep.subr.mxu0 0.0
        %518 = vmatpush1.msra.mxu0 0.0
        %519 = vmatprep.subr.mxu0 0.0
        %520 = vmatpush1.msra.mxu0 0.0
        %521 = vmatprep.subr.mxu0 0.0
        %522 = vmatpush1.msra.mxu0 0.0
        %523 = vmatprep.subr.mxu0 0.0
        %524 = vmatpush1.msra.mxu0 0.0
        %525 = vmatprep.subr.mxu0 0.0
        %526 = vmatpush1.msra.mxu0 0.0
        %527 = vmatprep.subr.mxu0 0.0
        %528 = vmatpush1.msra.mxu0 0.0
        %529 = vmatprep.subr.mxu0 0.0
        %530 = vmatpush1.msra.mxu0 0.0
        %531 = vmatprep.subr.mxu0 0.0
        %532 = vmatpush1.msra.mxu0 0.0
        %533 = vmatprep.subr.mxu0 0.0
        %534 = vmatpush1.msra.mxu0 0.0
        %535 = vmatprep.subr.mxu0 0.0
        %536 = vmatpush1.msra.mxu0 0.0
        %537 = vmatprep.subr.mxu0 0.0
        %538 = vmatpush1.msra.mxu0 0.0
        %539 = vmatprep.subr.mxu0 0.0
        %540 = vmatpush1.msra.mxu0 0.0
        %541 = vmatprep.subr.mxu0 0.0
        %542 = vmatpush1.msra.mxu0 0.0
        %543 = vmatprep.subr.mxu0 0.0
        %544 = vmatpush1.msra.mxu0 0.0
        %545 = vmatprep.subr.mxu0 0.0
        %546 = vmatpush1.msra.mxu0 0.0
        %547 = vmatprep.subr.mxu0 0.0
        %548 = vmatpush1.msra.mxu0 0.0
        %549 = vmatprep.subr.mxu0 0.0
        %550 = vmatpush1.msra.mxu0 0.0
        %551 = vmatprep.subr.mxu0 0.0
        %552 = vmatpush1.msra.mxu0 0.0
        %553 = vmatprep.subr.mxu0 0.0
        %554 = vmatpush1.msra.mxu0 0.0
        %555 = vmatprep.subr.mxu0 0.0
        %556 = vmatpush1.msra.mxu0 0.0
        %557 = vmatprep.subr.mxu0 0.0
        %558 = vmatpush1.msra.mxu0 0.0
        %559 = vmatprep.mubr.f32.mxu0 0.0
        %560 = vmatmul.mubr.f32.gmra.mrb[0].mxu0 %v493
        %v561 = vpop.f32.mrb[0].mxu0
        %v562 = vadd.f32 %v489, %v561
        %v563 = vpop.f32.mrb[0].mxu0
        %v564 = vadd.f32 %v489, %v563
        %565 = vdwg.mxu0
        %566 = vmatprep.subr.mxu0 0.0
        %567 = vmatpush1.msra.mxu0 %v460
        %568 = vmatprep.subr.mxu0 0.0
        %569 = vmatpush1.msra.mxu0 %v463
        %570 = vmatprep.subr.mxu0 0.0
        %571 = vmatpush1.msra.mxu0 %v466
        %572 = vmatprep.subr.mxu0 0.0
        %573 = vmatpush1.msra.mxu0 %v469
        %574 = vmatprep.subr.mxu0 0.0
        %575 = vmatpush1.msra.mxu0 %v472
        %576 = vmatprep.subr.mxu0 0.0
        %577 = vmatpush1.msra.mxu0 %v475
        %578 = vmatprep.subr.mxu0 0.0
        %579 = vmatpush1.msra.mxu0 %v478
        %580 = vmatprep.subr.mxu0 0.0
        %581 = vmatpush1.msra.mxu0 %v481
        %582 = vmatprep.subr.mxu0 0.0
        %583 = vmatpush1.msra.mxu0 %v484
        %584 = vmatprep.subr.mxu0 0.0
        %585 = vmatpush1.msra.mxu0 0.0
        %586 = vmatprep.subr.mxu0 0.0
        %587 = vmatpush1.msra.mxu0 0.0
        %588 = vmatprep.subr.mxu0 0.0
        %589 = vmatpush1.msra.mxu0 0.0
        %590 = vmatprep.subr.mxu0 0.0
        %591 = vmatpush1.msra.mxu0 0.0
        %592 = vmatprep.subr.mxu0 0.0
        %593 = vmatpush1.msra.mxu0 0.0
        %594 = vmatprep.subr.mxu0 0.0
        %595 = vmatpush1.msra.mxu0 0.0
        %596 = vmatprep.subr.mxu0 0.0
        %597 = vmatpush1.msra.mxu0 0.0
        %598 = vmatprep.subr.mxu0 0.0
        %599 = vmatpush1.msra.mxu0 0.0
        %600 = vmatprep.subr.mxu0 0.0
        %601 = vmatpush1.msra.mxu0 0.0
        %602 = vmatprep.subr.mxu0 0.0
        %603 = vmatpush1.msra.mxu0 0.0
        %604 = vmatprep.subr.mxu0 0.0
        %605 = vmatpush1.msra.mxu0 0.0
        %606 = vmatprep.subr.mxu0 0.0
        %607 = vmatpush1.msra.mxu0 0.0
        %608 = vmatprep.subr.mxu0 0.0
        %609 = vmatpush1.msra.mxu0 0.0
        %610 = vmatprep.subr.mxu0 0.0
        %611 = vmatpush1.msra.mxu0 0.0
        %612 = vmatprep.subr.mxu0 0.0
        %613 = vmatpush1.msra.mxu0 0.0
        %614 = vmatprep.subr.mxu0 0.0
        %615 = vmatpush1.msra.mxu0 0.0
        %616 = vmatprep.subr.mxu0 0.0
        %617 = vmatpush1.msra.mxu0 0.0
        %618 = vmatprep.subr.mxu0 0.0
        %619 = vmatpush1.msra.mxu0 0.0
        %620 = vmatprep.subr.mxu0 0.0
        %621 = vmatpush1.msra.mxu0 0.0
        %622 = vmatprep.subr.mxu0 0.0
        %623 = vmatpush1.msra.mxu0 0.0
        %624 = vmatprep.subr.mxu0 0.0
        %625 = vmatpush1.msra.mxu0 0.0
        %626 = vmatprep.subr.mxu0 0.0
        %627 = vmatpush1.msra.mxu0 0.0
        %628 = vmatprep.subr.mxu0 0.0
        %629 = vmatpush1.msra.mxu0 0.0
        %630 = vmatprep.mubr.f32.mxu0 0.0
        %631 = vmatmul.mubr.f32.gmra.mrb[0].mxu0 %v493
        %v632 = vpop.f32.mrb[0].mxu0
        %v633 = vadd.f32 %v489, %v632
        %v634 = vpop.f32.mrb[0].mxu0
        %635 = vdwg.mxu0
        %v636 = vmax.f32 %v562, 0.0
        %v637 = vmax.f32 %v564, 0.0
        %v638 = vmax.f32 %v633, 0.0
        %v640 = vlaneseq
        %v641 = vshrl.u32 %v640, 7
        %v642 = vsub.s32 0, %v641
        %v643 = vrot.slane %v322, %v642
        %v644 = vlaneseq
        %v645 = vshrl.u32 %v644, 7
        %v646 = vsub.s32 1, %v645
        %v647 = vrot.slane %v322, %v646
        %v648 = vlaneseq
        %v649 = vshrl.u32 %v648, 7
        %v650 = vsub.s32 2, %v649
        %v651 = vrot.slane %v322, %v650
        %v655 = vmul.f32 %v636, %v643
        %v656 = vmul.f32 %v637, %v647
        %v657 = vmul.f32 %v638, %v651
        %661 = vrot.lane.b32.xlu0 %v655, 19
        %v662 = vpop.permute.xlu0 %661
        %663 = vrot.lane.b32.xlu0 %v656, 19
        %v664 = vpop.permute.xlu0 %663
        %665 = vrot.lane.b32.xlu0 %v657, 19
        %v666 = vpop.permute.xlu0 %665
        %v667 = vsel %vm323, %v662, %v664
        %v668 = vsel %vm323, %v664, %v666
        %vm672 = vcmask 1047704
        %673 = vst.msk [vmem:[#allocation2] sm:$0xff] %vm672, %v662
        %674 = vst [vmem:[#allocation2 + $0x8] sm:$0xff] %v667
        %vm675 = vcmask 711680
        %676 = vst.msk [vmem:[#allocation2 + $0x10] sm:$0xff] %vm675, %v668
        %v677 = vld [vmem:[#allocation2] sm:$0xff]
        %v678 = vld [vmem:[#allocation2 + $0x8] sm:$0xff]
        %v679 = vld [vmem:[#allocation2 + $0x10] sm:$0xff]
        %680 = vst [vmem:[#allocation4] sm:$0xff] %v677
        %681 = vst [vmem:[#allocation4 + $0x8] sm:$0xff] %v678
        %682 = vst.msk [vmem:[#allocation4 + $0x10] sm:$0xff] %vm332, %v679
        %686 = vrot.lane.b32.xlu0 %v677, 127
        %v687 = vpop.permute.xlu0 %686
        %688 = vrot.lane.b32.xlu0 %v678, 127
        %v689 = vpop.permute.xlu0 %688
        %690 = vrot.lane.b32.xlu0 %v679, 127
        %v691 = vpop.permute.xlu0 %690
        %v692 = vsel %vm343, %v687, %v689
        %v693 = vsel %vm343, %v689, %v691
        %697 = vst [vmem:[#allocation4 + $0x18] sm:$0xff] %v692
        %698 = vst [vmem:[#allocation4 + $0x20] sm:$0xff] %v693
        %699 = vst.msk [vmem:[#allocation4 + $0x28] sm:$0xff] %vm332, %v691
        %700 = vrot.lane.b32.xlu0 %v677, 126
        %v701 = vpop.permute.xlu0 %700
        %702 = vrot.lane.b32.xlu0 %v678, 126
        %v703 = vpop.permute.xlu0 %702
        %704 = vrot.lane.b32.xlu0 %v679, 126
        %v705 = vpop.permute.xlu0 %704
        %v706 = vsel %vm358, %v701, %v703
        %v707 = vsel %vm358, %v703, %v705
        %711 = vst [vmem:[#allocation4 + $0x30] sm:$0xff] %v706
        %712 = vst [vmem:[#allocation4 + $0x38] sm:$0xff] %v707
        %713 = vst.msk [vmem:[#allocation4 + $0x40] sm:$0xff] %vm332, %v705
        %714 = vrot.lane.b32.xlu0 %v677, 110
        %v715 = vpop.permute.xlu0 %714
        %716 = vrot.lane.b32.xlu0 %v678, 110
        %v717 = vpop.permute.xlu0 %716
        %718 = vrot.lane.b32.xlu0 %v679, 110
        %v719 = vpop.permute.xlu0 %718
        %v720 = vsel %vm373, %v715, %v717
        %v721 = vsel %vm373, %v717, %v719
        %725 = vst [vmem:[#allocation4 + $0x48] sm:$0xff] %v720
        %726 = vst [vmem:[#allocation4 + $0x50] sm:$0xff] %v721
        %727 = vst.msk [vmem:[#allocation4 + $0x58] sm:$0xff] %vm332, %v719
        %728 = vrot.lane.b32.xlu0 %v677, 109
        %v729 = vpop.permute.xlu0 %728
        %730 = vrot.lane.b32.xlu0 %v678, 109
        %v731 = vpop.permute.xlu0 %730
        %732 = vrot.lane.b32.xlu0 %v679, 109
        %v733 = vpop.permute.xlu0 %732
        %v734 = vsel %vm388, %v729, %v731
        %v735 = vsel %vm388, %v731, %v733
        %739 = vst [vmem:[#allocation4 + $0x60] sm:$0xff] %v734
        %740 = vst [vmem:[#allocation4 + $0x68] sm:$0xff] %v735
        %741 = vst.msk [vmem:[#allocation4 + $0x70] sm:$0xff] %vm332, %v733
        %742 = vrot.lane.b32.xlu0 %v677, 108
        %v743 = vpop.permute.xlu0 %742
        %744 = vrot.lane.b32.xlu0 %v678, 108
        %v745 = vpop.permute.xlu0 %744
        %746 = vrot.lane.b32.xlu0 %v679, 108
        %v747 = vpop.permute.xlu0 %746
        %v748 = vsel %vm403, %v743, %v745
        %v749 = vsel %vm403, %v745, %v747
        %753 = vst [vmem:[#allocation4 + $0x78] sm:$0xff] %v748
        %754 = vst [vmem:[#allocation4 + $0x80] sm:$0xff] %v749
        %755 = vst.msk [vmem:[#allocation4 + $0x88] sm:$0xff] %vm332, %v747
        %756 = vrot.lane.b32.xlu0 %v677, 92
        %v757 = vpop.permute.xlu0 %756
        %758 = vrot.lane.b32.xlu0 %v678, 92
        %v759 = vpop.permute.xlu0 %758
        %760 = vrot.lane.b32.xlu0 %v679, 92
        %v761 = vpop.permute.xlu0 %760
        %v762 = vsel %vm418, %v757, %v759
        %v763 = vsel %vm418, %v759, %v761
        %767 = vst [vmem:[#allocation4 + $0x90] sm:$0xff] %v762
        %768 = vst [vmem:[#allocation4 + $0x98] sm:$0xff] %v763
        %769 = vst.msk [vmem:[#allocation4 + $0xa0] sm:$0xff] %vm332, %v761
        %770 = vrot.lane.b32.xlu0 %v677, 91
        %v771 = vpop.permute.xlu0 %770
        %772 = vrot.lane.b32.xlu0 %v678, 91
        %v773 = vpop.permute.xlu0 %772
        %774 = vrot.lane.b32.xlu0 %v679, 91
        %v775 = vpop.permute.xlu0 %774
        %v776 = vsel %vm433, %v771, %v773
        %v777 = vsel %vm433, %v773, %v775
        %781 = vst [vmem:[#allocation4 + $0xa8] sm:$0xff] %v776
        %782 = vst [vmem:[#allocation4 + $0xb0] sm:$0xff] %v777
        %783 = vst.msk [vmem:[#allocation4 + $0xb8] sm:$0xff] %vm332, %v775
        %784 = vrot.lane.b32.xlu0 %v677, 90
        %v785 = vpop.permute.xlu0 %784
        %786 = vrot.lane.b32.xlu0 %v678, 90
        %v787 = vpop.permute.xlu0 %786
        %788 = vrot.lane.b32.xlu0 %v679, 90
        %v789 = vpop.permute.xlu0 %788
        %v790 = vsel %vm448, %v785, %v787
        %v791 = vsel %vm448, %v787, %v789
        %795 = vst [vmem:[#allocation4 + $0xc0] sm:$0xff] %v790
        %796 = vst [vmem:[#allocation4 + $0xc8] sm:$0xff] %v791
        %797 = vst.msk [vmem:[#allocation4 + $0xd0] sm:$0xff] %vm332, %v789
        %v798 = vld [vmem:[%s4] sm:$0xff]
        %v799 = vld [vmem:[#allocation4] sm:$0xff]
        %v800 = vld [vmem:[#allocation4 + $0x8] sm:$0xff]
        %v801 = vld [vmem:[#allocation4 + $0x10] sm:$0xff]
        %v802 = vld [vmem:[#allocation4 + $0x18] sm:$0xff]
        %v803 = vld [vmem:[#allocation4 + $0x20] sm:$0xff]
        %v804 = vld [vmem:[#allocation4 + $0x28] sm:$0xff]
        %v805 = vld [vmem:[#allocation4 + $0x30] sm:$0xff]
        %v806 = vld [vmem:[#allocation4 + $0x38] sm:$0xff]
        %v807 = vld [vmem:[#allocation4 + $0x40] sm:$0xff]
        %v808 = vld [vmem:[#allocation4 + $0x48] sm:$0xff]
        %v809 = vld [vmem:[#allocation4 + $0x50] sm:$0xff]
        %v810 = vld [vmem:[#allocation4 + $0x58] sm:$0xff]
        %v811 = vld [vmem:[#allocation4 + $0x60] sm:$0xff]
        %v812 = vld [vmem:[#allocation4 + $0x68] sm:$0xff]
        %v813 = vld [vmem:[#allocation4 + $0x70] sm:$0xff]
        %v814 = vld [vmem:[#allocation4 + $0x78] sm:$0xff]
        %v815 = vld [vmem:[#allocation4 + $0x80] sm:$0xff]
        %v816 = vld [vmem:[#allocation4 + $0x88] sm:$0xff]
        %v817 = vld [vmem:[#allocation4 + $0x90] sm:$0xff]
        %v818 = vld [vmem:[#allocation4 + $0x98] sm:$0xff]
        %v819 = vld [vmem:[#allocation4 + $0xa0] sm:$0xff]
        %v820 = vld [vmem:[#allocation4 + $0xa8] sm:$0xff]
        %v821 = vld [vmem:[#allocation4 + $0xb0] sm:$0xff]
        %v822 = vld [vmem:[#allocation4 + $0xb8] sm:$0xff]
        %v823 = vld [vmem:[#allocation4 + $0xc0] sm:$0xff]
        %v824 = vld [vmem:[#allocation4 + $0xc8] sm:$0xff]
        %v825 = vld [vmem:[#allocation4 + $0xd0] sm:$0xff]
        %v826 = vld [vmem:[%s5] sm:$0xff]
        %828 = vset.pattern.permute.xlu0 0
        %829 = vperm.xlu0 %828, %v826
        %v830 = vpop.permute.xlu0 %829
        %v833 = vsel %vm491, %v798, 0
        %835 = vmatprep.subr.mxu0 %v800
        %836 = vmatpush1.msra.mxu0 %v799
        %837 = vmatprep.subr.mxu0 %v803
        %838 = vmatpush1.msra.mxu0 %v802
        %839 = vmatprep.subr.mxu0 %v806
        %840 = vmatpush1.msra.mxu0 %v805
        %841 = vmatprep.subr.mxu0 %v809
        %842 = vmatpush1.msra.mxu0 %v808
        %843 = vmatprep.subr.mxu0 %v812
        %844 = vmatpush1.msra.mxu0 %v811
        %845 = vmatprep.subr.mxu0 %v815
        %846 = vmatpush1.msra.mxu0 %v814
        %847 = vmatprep.subr.mxu0 %v818
        %848 = vmatpush1.msra.mxu0 %v817
        %849 = vmatprep.subr.mxu0 %v821
        %850 = vmatpush1.msra.mxu0 %v820
        %851 = vmatprep.subr.mxu0 %v824
        %852 = vmatpush1.msra.mxu0 %v823
        %853 = vmatprep.subr.mxu0 0.0
        %854 = vmatpush1.msra.mxu0 0.0
        %855 = vmatprep.subr.mxu0 0.0
        %856 = vmatpush1.msra.mxu0 0.0
        %857 = vmatprep.subr.mxu0 0.0
        %858 = vmatpush1.msra.mxu0 0.0
        %859 = vmatprep.subr.mxu0 0.0
        %860 = vmatpush1.msra.mxu0 0.0
        %861 = vmatprep.subr.mxu0 0.0
        %862 = vmatpush1.msra.mxu0 0.0
        %863 = vmatprep.subr.mxu0 0.0
        %864 = vmatpush1.msra.mxu0 0.0
        %865 = vmatprep.subr.mxu0 0.0
        %866 = vmatpush1.msra.mxu0 0.0
        %867 = vmatprep.subr.mxu0 0.0
        %868 = vmatpush1.msra.mxu0 0.0
        %869 = vmatprep.subr.mxu0 0.0
        %870 = vmatpush1.msra.mxu0 0.0
        %871 = vmatprep.subr.mxu0 0.0
        %872 = vmatpush1.msra.mxu0 0.0
        %873 = vmatprep.subr.mxu0 0.0
        %874 = vmatpush1.msra.mxu0 0.0
        %875 = vmatprep.subr.mxu0 0.0
        %876 = vmatpush1.msra.mxu0 0.0
        %877 = vmatprep.subr.mxu0 0.0
        %878 = vmatpush1.msra.mxu0 0.0
        %879 = vmatprep.subr.mxu0 0.0
        %880 = vmatpush1.msra.mxu0 0.0
        %881 = vmatprep.subr.mxu0 0.0
        %882 = vmatpush1.msra.mxu0 0.0
        %883 = vmatprep.subr.mxu0 0.0
        %884 = vmatpush1.msra.mxu0 0.0
        %885 = vmatprep.subr.mxu0 0.0
        %886 = vmatpush1.msra.mxu0 0.0
        %887 = vmatprep.subr.mxu0 0.0
        %888 = vmatpush1.msra.mxu0 0.0
        %889 = vmatprep.subr.mxu0 0.0
        %890 = vmatpush1.msra.mxu0 0.0
        %891 = vmatprep.subr.mxu0 0.0
        %892 = vmatpush1.msra.mxu0 0.0
        %893 = vmatprep.subr.mxu0 0.0
        %894 = vmatpush1.msra.mxu0 0.0
        %895 = vmatprep.subr.mxu0 0.0
        %896 = vmatpush1.msra.mxu0 0.0
        %897 = vmatprep.subr.mxu0 0.0
        %898 = vmatpush1.msra.mxu0 0.0
        %899 = vmatprep.mubr.f32.mxu0 0.0
        %900 = vmatmul.mubr.f32.gmra.mrb[0].mxu0 %v833
        %v901 = vpop.f32.mrb[0].mxu0
        %v902 = vadd.f32 %v830, %v901
        %v903 = vpop.f32.mrb[0].mxu0
        %v904 = vadd.f32 %v830, %v903
        %905 = vdwg.mxu0
        %906 = vmatprep.subr.mxu0 0.0
        %907 = vmatpush1.msra.mxu0 %v801
        %908 = vmatprep.subr.mxu0 0.0
        %909 = vmatpush1.msra.mxu0 %v804
        %910 = vmatprep.subr.mxu0 0.0
        %911 = vmatpush1.msra.mxu0 %v807
        %912 = vmatprep.subr.mxu0 0.0
        %913 = vmatpush1.msra.mxu0 %v810
        %914 = vmatprep.subr.mxu0 0.0
        %915 = vmatpush1.msra.mxu0 %v813
        %916 = vmatprep.subr.mxu0 0.0
        %917 = vmatpush1.msra.mxu0 %v816
        %918 = vmatprep.subr.mxu0 0.0
        %919 = vmatpush1.msra.mxu0 %v819
        %920 = vmatprep.subr.mxu0 0.0
        %921 = vmatpush1.msra.mxu0 %v822
        %922 = vmatprep.subr.mxu0 0.0
        %923 = vmatpush1.msra.mxu0 %v825
        %924 = vmatprep.subr.mxu0 0.0
        %925 = vmatpush1.msra.mxu0 0.0
        %926 = vmatprep.subr.mxu0 0.0
        %927 = vmatpush1.msra.mxu0 0.0
        %928 = vmatprep.subr.mxu0 0.0
        %929 = vmatpush1.msra.mxu0 0.0
        %930 = vmatprep.subr.mxu0 0.0
        %931 = vmatpush1.msra.mxu0 0.0
        %932 = vmatprep.subr.mxu0 0.0
        %933 = vmatpush1.msra.mxu0 0.0
        %934 = vmatprep.subr.mxu0 0.0
        %935 = vmatpush1.msra.mxu0 0.0
        %936 = vmatprep.subr.mxu0 0.0
        %937 = vmatpush1.msra.mxu0 0.0
        %938 = vmatprep.subr.mxu0 0.0
        %939 = vmatpush1.msra.mxu0 0.0
        %940 = vmatprep.subr.mxu0 0.0
        %941 = vmatpush1.msra.mxu0 0.0
        %942 = vmatprep.subr.mxu0 0.0
        %943 = vmatpush1.msra.mxu0 0.0
        %944 = vmatprep.subr.mxu0 0.0
        %945 = vmatpush1.msra.mxu0 0.0
        %946 = vmatprep.subr.mxu0 0.0
        %947 = vmatpush1.msra.mxu0 0.0
        %948 = vmatprep.subr.mxu0 0.0
        %949 = vmatpush1.msra.mxu0 0.0
        %950 = vmatprep.subr.mxu0 0.0
        %951 = vmatpush1.msra.mxu0 0.0
        %952 = vmatprep.subr.mxu0 0.0
        %953 = vmatpush1.msra.mxu0 0.0
        %954 = vmatprep.subr.mxu0 0.0
        %955 = vmatpush1.msra.mxu0 0.0
        %956 = vmatprep.subr.mxu0 0.0
        %957 = vmatpush1.msra.mxu0 0.0
        %958 = vmatprep.subr.mxu0 0.0
        %959 = vmatpush1.msra.mxu0 0.0
        %960 = vmatprep.subr.mxu0 0.0
        %961 = vmatpush1.msra.mxu0 0.0
        %962 = vmatprep.subr.mxu0 0.0
        %963 = vmatpush1.msra.mxu0 0.0
        %964 = vmatprep.subr.mxu0 0.0
        %965 = vmatpush1.msra.mxu0 0.0
        %966 = vmatprep.subr.mxu0 0.0
        %967 = vmatpush1.msra.mxu0 0.0
        %968 = vmatprep.subr.mxu0 0.0
        %969 = vmatpush1.msra.mxu0 0.0
        %970 = vmatprep.mubr.f32.mxu0 0.0
        %971 = vmatmul.mubr.f32.gmra.mrb[0].mxu0 %v833
        %v972 = vpop.f32.mrb[0].mxu0
        %v973 = vadd.f32 %v830, %v972
        %v974 = vpop.f32.mrb[0].mxu0
        %975 = vdwg.mxu0
        %v976 = vmax.f32 %v902, 0.0
        %v977 = vmax.f32 %v904, 0.0
        %v978 = vmax.f32 %v973, 0.0
        %v979 = vmul.f32 %v976, %v643
        %v980 = vmul.f32 %v977, %v647
        %v981 = vmul.f32 %v978, %v651
        %985 = vrot.lane.b32.xlu0 %v979, 19
        %v986 = vpop.permute.xlu0 %985
        %987 = vrot.lane.b32.xlu0 %v980, 19
        %v988 = vpop.permute.xlu0 %987
        %989 = vrot.lane.b32.xlu0 %v981, 19
        %v990 = vpop.permute.xlu0 %989
        %v991 = vsel %vm323, %v986, %v988
        %v992 = vsel %vm323, %v988, %v990
        %996 = vst.msk [vmem:[#allocation2] sm:$0xff] %vm672, %v986
        %997 = vst [vmem:[#allocation2 + $0x8] sm:$0xff] %v991
        %998 = vst.msk [vmem:[#allocation2 + $0x10] sm:$0xff] %vm675, %v992
        %v999 = vld [vmem:[#allocation2] sm:$0xff]
        %v1000 = vld [vmem:[#allocation2 + $0x8] sm:$0xff]
        %v1001 = vld [vmem:[#allocation2 + $0x10] sm:$0xff]
        %1002 = vst [vmem:[#allocation4] sm:$0xff] %v999
        %1003 = vst [vmem:[#allocation4 + $0x8] sm:$0xff] %v1000
        %1004 = vst.msk [vmem:[#allocation4 + $0x10] sm:$0xff] %vm332, %v1001
        %1008 = vrot.lane.b32.xlu0 %v999, 127
        %v1009 = vpop.permute.xlu0 %1008
        %1010 = vrot.lane.b32.xlu0 %v1000, 127
        %v1011 = vpop.permute.xlu0 %1010
        %1012 = vrot.lane.b32.xlu0 %v1001, 127
        %v1013 = vpop.permute.xlu0 %1012
        %v1014 = vsel %vm343, %v1009, %v1011
        %v1015 = vsel %vm343, %v1011, %v1013
        %1019 = vst [vmem:[#allocation4 + $0x18] sm:$0xff] %v1014
        %1020 = vst [vmem:[#allocation4 + $0x20] sm:$0xff] %v1015
        %1021 = vst.msk [vmem:[#allocation4 + $0x28] sm:$0xff] %vm332, %v1013
        %1022 = vrot.lane.b32.xlu0 %v999, 126
        %v1023 = vpop.permute.xlu0 %1022
        %1024 = vrot.lane.b32.xlu0 %v1000, 126
        %v1025 = vpop.permute.xlu0 %1024
        %1026 = vrot.lane.b32.xlu0 %v1001, 126
        %v1027 = vpop.permute.xlu0 %1026
        %v1028 = vsel %vm358, %v1023, %v1025
        %v1029 = vsel %vm358, %v1025, %v1027
        %1033 = vst [vmem:[#allocation4 + $0x30] sm:$0xff] %v1028
        %1034 = vst [vmem:[#allocation4 + $0x38] sm:$0xff] %v1029
        %1035 = vst.msk [vmem:[#allocation4 + $0x40] sm:$0xff] %vm332, %v1027
        %1036 = vrot.lane.b32.xlu0 %v999, 110
        %v1037 = vpop.permute.xlu0 %1036
        %1038 = vrot.lane.b32.xlu0 %v1000, 110
        %v1039 = vpop.permute.xlu0 %1038
        %1040 = vrot.lane.b32.xlu0 %v1001, 110
        %v1041 = vpop.permute.xlu0 %1040
        %v1042 = vsel %vm373, %v1037, %v1039
        %v1043 = vsel %vm373, %v1039, %v1041
        %1047 = vst [vmem:[#allocation4 + $0x48] sm:$0xff] %v1042
        %1048 = vst [vmem:[#allocation4 + $0x50] sm:$0xff] %v1043
        %1049 = vst.msk [vmem:[#allocation4 + $0x58] sm:$0xff] %vm332, %v1041
        %1050 = vrot.lane.b32.xlu0 %v999, 109
        %v1051 = vpop.permute.xlu0 %1050
        %1052 = vrot.lane.b32.xlu0 %v1000, 109
        %v1053 = vpop.permute.xlu0 %1052
        %1054 = vrot.lane.b32.xlu0 %v1001, 109
        %v1055 = vpop.permute.xlu0 %1054
        %v1056 = vsel %vm388, %v1051, %v1053
        %v1057 = vsel %vm388, %v1053, %v1055
        %1061 = vst [vmem:[#allocation4 + $0x60] sm:$0xff] %v1056
        %1062 = vst [vmem:[#allocation4 + $0x68] sm:$0xff] %v1057
        %1063 = vst.msk [vmem:[#allocation4 + $0x70] sm:$0xff] %vm332, %v1055
        %1064 = vrot.lane.b32.xlu0 %v999, 108
        %v1065 = vpop.permute.xlu0 %1064
        %1066 = vrot.lane.b32.xlu0 %v1000, 108
        %v1067 = vpop.permute.xlu0 %1066
        %1068 = vrot.lane.b32.xlu0 %v1001, 108
        %v1069 = vpop.permute.xlu0 %1068
        %v1070 = vsel %vm403, %v1065, %v1067
        %v1071 = vsel %vm403, %v1067, %v1069
        %1075 = vst [vmem:[#allocation4 + $0x78] sm:$0xff] %v1070
        %1076 = vst [vmem:[#allocation4 + $0x80] sm:$0xff] %v1071
        %1077 = vst.msk [vmem:[#allocation4 + $0x88] sm:$0xff] %vm332, %v1069
        %1078 = vrot.lane.b32.xlu0 %v999, 92
        %v1079 = vpop.permute.xlu0 %1078
        %1080 = vrot.lane.b32.xlu0 %v1000, 92
        %v1081 = vpop.permute.xlu0 %1080
        %1082 = vrot.lane.b32.xlu0 %v1001, 92
        %v1083 = vpop.permute.xlu0 %1082
        %v1084 = vsel %vm418, %v1079, %v1081
        %v1085 = vsel %vm418, %v1081, %v1083
        %1089 = vst [vmem:[#allocation4 + $0x90] sm:$0xff] %v1084
        %1090 = vst [vmem:[#allocation4 + $0x98] sm:$0xff] %v1085
        %1091 = vst.msk [vmem:[#allocation4 + $0xa0] sm:$0xff] %vm332, %v1083
        %1092 = vrot.lane.b32.xlu0 %v999, 91
        %v1093 = vpop.permute.xlu0 %1092
        %1094 = vrot.lane.b32.xlu0 %v1000, 91
        %v1095 = vpop.permute.xlu0 %1094
        %1096 = vrot.lane.b32.xlu0 %v1001, 91
        %v1097 = vpop.permute.xlu0 %1096
        %v1098 = vsel %vm433, %v1093, %v1095
        %v1099 = vsel %vm433, %v1095, %v1097
        %1103 = vst [vmem:[#allocation4 + $0xa8] sm:$0xff] %v1098
        %1104 = vst [vmem:[#allocation4 + $0xb0] sm:$0xff] %v1099
        %1105 = vst.msk [vmem:[#allocation4 + $0xb8] sm:$0xff] %vm332, %v1097
        %1106 = vrot.lane.b32.xlu0 %v999, 90
        %v1107 = vpop.permute.xlu0 %1106
        %1108 = vrot.lane.b32.xlu0 %v1000, 90
        %v1109 = vpop.permute.xlu0 %1108
        %1110 = vrot.lane.b32.xlu0 %v1001, 90
        %v1111 = vpop.permute.xlu0 %1110
        %v1112 = vsel %vm448, %v1107, %v1109
        %v1113 = vsel %vm448, %v1109, %v1111
        %1117 = vst [vmem:[#allocation4 + $0xc0] sm:$0xff] %v1112
        %1118 = vst [vmem:[#allocation4 + $0xc8] sm:$0xff] %v1113
        %1119 = vst.msk [vmem:[#allocation4 + $0xd0] sm:$0xff] %vm332, %v1111
        %v1120 = vld [vmem:[%s6] sm:$0xff]
        %v1121 = vld [vmem:[#allocation4] sm:$0xff]
        %v1122 = vld [vmem:[#allocation4 + $0x8] sm:$0xff]
        %v1123 = vld [vmem:[#allocation4 + $0x10] sm:$0xff]
        %v1124 = vld [vmem:[#allocation4 + $0x18] sm:$0xff]
        %v1125 = vld [vmem:[#allocation4 + $0x20] sm:$0xff]
        %v1126 = vld [vmem:[#allocation4 + $0x28] sm:$0xff]
        %v1127 = vld [vmem:[#allocation4 + $0x30] sm:$0xff]
        %v1128 = vld [vmem:[#allocation4 + $0x38] sm:$0xff]
        %v1129 = vld [vmem:[#allocation4 + $0x40] sm:$0xff]
        %v1130 = vld [vmem:[#allocation4 + $0x48] sm:$0xff]
        %v1131 = vld [vmem:[#allocation4 + $0x50] sm:$0xff]
        %v1132 = vld [vmem:[#allocation4 + $0x58] sm:$0xff]
        %v1133 = vld [vmem:[#allocation4 + $0x60] sm:$0xff]
        %v1134 = vld [vmem:[#allocation4 + $0x68] sm:$0xff]
        %v1135 = vld [vmem:[#allocation4 + $0x70] sm:$0xff]
        %v1136 = vld [vmem:[#allocation4 + $0x78] sm:$0xff]
        %v1137 = vld [vmem:[#allocation4 + $0x80] sm:$0xff]
        %v1138 = vld [vmem:[#allocation4 + $0x88] sm:$0xff]
        %v1139 = vld [vmem:[#allocation4 + $0x90] sm:$0xff]
        %v1140 = vld [vmem:[#allocation4 + $0x98] sm:$0xff]
        %v1141 = vld [vmem:[#allocation4 + $0xa0] sm:$0xff]
        %v1142 = vld [vmem:[#allocation4 + $0xa8] sm:$0xff]
        %v1143 = vld [vmem:[#allocation4 + $0xb0] sm:$0xff]
        %v1144 = vld [vmem:[#allocation4 + $0xb8] sm:$0xff]
        %v1145 = vld [vmem:[#allocation4 + $0xc0] sm:$0xff]
        %v1146 = vld [vmem:[#allocation4 + $0xc8] sm:$0xff]
        %v1147 = vld [vmem:[#allocation4 + $0xd0] sm:$0xff]
        %v1148 = vld [vmem:[%s7] sm:$0xff]
        %1150 = vset.pattern.permute.xlu0 0
        %1151 = vperm.xlu0 %1150, %v1148
        %v1152 = vpop.permute.xlu0 %1151
        %v1155 = vsel %vm491, %v1120, 0
        %1157 = vmatprep.subr.mxu0 %v1122
        %1158 = vmatpush1.msra.mxu0 %v1121
        %1159 = vmatprep.subr.mxu0 %v1125
        %1160 = vmatpush1.msra.mxu0 %v1124
        %1161 = vmatprep.subr.mxu0 %v1128
        %1162 = vmatpush1.msra.mxu0 %v1127
        %1163 = vmatprep.subr.mxu0 %v1131
        %1164 = vmatpush1.msra.mxu0 %v1130
        %1165 = vmatprep.subr.mxu0 %v1134
        %1166 = vmatpush1.msra.mxu0 %v1133
        %1167 = vmatprep.subr.mxu0 %v1137
        %1168 = vmatpush1.msra.mxu0 %v1136
        %1169 = vmatprep.subr.mxu0 %v1140
        %1170 = vmatpush1.msra.mxu0 %v1139
        %1171 = vmatprep.subr.mxu0 %v1143
        %1172 = vmatpush1.msra.mxu0 %v1142
        %1173 = vmatprep.subr.mxu0 %v1146
        %1174 = vmatpush1.msra.mxu0 %v1145
        %1175 = vmatprep.subr.mxu0 0.0
        %1176 = vmatpush1.msra.mxu0 0.0
        %1177 = vmatprep.subr.mxu0 0.0
        %1178 = vmatpush1.msra.mxu0 0.0
        %1179 = vmatprep.subr.mxu0 0.0
        %1180 = vmatpush1.msra.mxu0 0.0
        %1181 = vmatprep.subr.mxu0 0.0
        %1182 = vmatpush1.msra.mxu0 0.0
        %1183 = vmatprep.subr.mxu0 0.0
        %1184 = vmatpush1.msra.mxu0 0.0
        %1185 = vmatprep.subr.mxu0 0.0
        %1186 = vmatpush1.msra.mxu0 0.0
        %1187 = vmatprep.subr.mxu0 0.0
        %1188 = vmatpush1.msra.mxu0 0.0
        %1189 = vmatprep.subr.mxu0 0.0
        %1190 = vmatpush1.msra.mxu0 0.0
        %1191 = vmatprep.subr.mxu0 0.0
        %1192 = vmatpush1.msra.mxu0 0.0
        %1193 = vmatprep.subr.mxu0 0.0
        %1194 = vmatpush1.msra.mxu0 0.0
        %1195 = vmatprep.subr.mxu0 0.0
        %1196 = vmatpush1.msra.mxu0 0.0
        %1197 = vmatprep.subr.mxu0 0.0
        %1198 = vmatpush1.msra.mxu0 0.0
        %1199 = vmatprep.subr.mxu0 0.0
        %1200 = vmatpush1.msra.mxu0 0.0
        %1201 = vmatprep.subr.mxu0 0.0
        %1202 = vmatpush1.msra.mxu0 0.0
        %1203 = vmatprep.subr.mxu0 0.0
        %1204 = vmatpush1.msra.mxu0 0.0
        %1205 = vmatprep.subr.mxu0 0.0
        %1206 = vmatpush1.msra.mxu0 0.0
        %1207 = vmatprep.subr.mxu0 0.0
        %1208 = vmatpush1.msra.mxu0 0.0
        %1209 = vmatprep.subr.mxu0 0.0
        %1210 = vmatpush1.msra.mxu0 0.0
        %1211 = vmatprep.subr.mxu0 0.0
        %1212 = vmatpush1.msra.mxu0 0.0
        %1213 = vmatprep.subr.mxu0 0.0
        %1214 = vmatpush1.msra.mxu0 0.0
        %1215 = vmatprep.subr.mxu0 0.0
        %1216 = vmatpush1.msra.mxu0 0.0
        %1217 = vmatprep.subr.mxu0 0.0
        %1218 = vmatpush1.msra.mxu0 0.0
        %1219 = vmatprep.subr.mxu0 0.0
        %1220 = vmatpush1.msra.mxu0 0.0
        %1221 = vmatprep.mubr.f32.mxu0 0.0
        %1222 = vmatmul.mubr.f32.gmra.mrb[0].mxu0 %v1155
        %v1223 = vpop.f32.mrb[0].mxu0
        %v1224 = vadd.f32 %v1152, %v1223
        %v1225 = vpop.f32.mrb[0].mxu0
        %v1226 = vadd.f32 %v1152, %v1225
        %1227 = vdwg.mxu0
        %1228 = vmatprep.subr.mxu0 0.0
        %1229 = vmatpush1.msra.mxu0 %v1123
        %1230 = vmatprep.subr.mxu0 0.0
        %1231 = vmatpush1.msra.mxu0 %v1126
        %1232 = vmatprep.subr.mxu0 0.0
        %1233 = vmatpush1.msra.mxu0 %v1129
        %1234 = vmatprep.subr.mxu0 0.0
        %1235 = vmatpush1.msra.mxu0 %v1132
        %1236 = vmatprep.subr.mxu0 0.0
        %1237 = vmatpush1.msra.mxu0 %v1135
        %1238 = vmatprep.subr.mxu0 0.0
        %1239 = vmatpush1.msra.mxu0 %v1138
        %1240 = vmatprep.subr.mxu0 0.0
        %1241 = vmatpush1.msra.mxu0 %v1141
        %1242 = vmatprep.subr.mxu0 0.0
        %1243 = vmatpush1.msra.mxu0 %v1144
        %1244 = vmatprep.subr.mxu0 0.0
        %1245 = vmatpush1.msra.mxu0 %v1147
        %1246 = vmatprep.subr.mxu0 0.0
        %1247 = vmatpush1.msra.mxu0 0.0
        %1248 = vmatprep.subr.mxu0 0.0
        %1249 = vmatpush1.msra.mxu0 0.0
        %1250 = vmatprep.subr.mxu0 0.0
        %1251 = vmatpush1.msra.mxu0 0.0
        %1252 = vmatprep.subr.mxu0 0.0
        %1253 = vmatpush1.msra.mxu0 0.0
        %1254 = vmatprep.subr.mxu0 0.0
        %1255 = vmatpush1.msra.mxu0 0.0
        %1256 = vmatprep.subr.mxu0 0.0
        %1257 = vmatpush1.msra.mxu0 0.0
        %1258 = vmatprep.subr.mxu0 0.0
        %1259 = vmatpush1.msra.mxu0 0.0
        %1260 = vmatprep.subr.mxu0 0.0
        %1261 = vmatpush1.msra.mxu0 0.0
        %1262 = vmatprep.subr.mxu0 0.0
        %1263 = vmatpush1.msra.mxu0 0.0
        %1264 = vmatprep.subr.mxu0 0.0
        %1265 = vmatpush1.msra.mxu0 0.0
        %1266 = vmatprep.subr.mxu0 0.0
        %1267 = vmatpush1.msra.mxu0 0.0
        %1268 = vmatprep.subr.mxu0 0.0
        %1269 = vmatpush1.msra.mxu0 0.0
        %1270 = vmatprep.subr.mxu0 0.0
        %1271 = vmatpush1.msra.mxu0 0.0
        %1272 = vmatprep.subr.mxu0 0.0
        %1273 = vmatpush1.msra.mxu0 0.0
        %1274 = vmatprep.subr.mxu0 0.0
        %1275 = vmatpush1.msra.mxu0 0.0
        %1276 = vmatprep.subr.mxu0 0.0
        %1277 = vmatpush1.msra.mxu0 0.0
        %1278 = vmatprep.subr.mxu0 0.0
        %1279 = vmatpush1.msra.mxu0 0.0
        %1280 = vmatprep.subr.mxu0 0.0
        %1281 = vmatpush1.msra.mxu0 0.0
        %1282 = vmatprep.subr.mxu0 0.0
        %1283 = vmatpush1.msra.mxu0 0.0
        %1284 = vmatprep.subr.mxu0 0.0
        %1285 = vmatpush1.msra.mxu0 0.0
        %1286 = vmatprep.subr.mxu0 0.0
        %1287 = vmatpush1.msra.mxu0 0.0
        %1288 = vmatprep.subr.mxu0 0.0
        %1289 = vmatpush1.msra.mxu0 0.0
        %1290 = vmatprep.subr.mxu0 0.0
        %1291 = vmatpush1.msra.mxu0 0.0
        %1292 = vmatprep.mubr.f32.mxu0 0.0
        %1293 = vmatmul.mubr.f32.gmra.mrb[0].mxu0 %v1155
        %v1294 = vpop.f32.mrb[0].mxu0
        %v1295 = vadd.f32 %v1152, %v1294
        %v1296 = vpop.f32.mrb[0].mxu0
        %1297 = vdwg.mxu0
        %v1298 = vadd.f32 %v655, %v1224
        %v1299 = vadd.f32 %v656, %v1226
        %v1300 = vadd.f32 %v657, %v1295
        %v1301 = vmax.f32 %v1298, 0.0
        %v1302 = vmax.f32 %v1299, 0.0
        %v1303 = vmax.f32 %v1300, 0.0
        %1304 = vst [vmem:[%s321] sm:$0xff] %v1301
        %1305 = vst [vmem:[%s321 + $0x8] sm:$0xff] %v1302
        %1306 = vst.msk [vmem:[%s321 + $0x10] sm:$0xff] %vm332, %v1303
        %s1307 = sand.u32 %s206, 1
        %s1308 = scalar_lea.sflag [#allocation7], %s1307
        %s1309 = sand.u32 %s206, 1
        %s1310 = smul.addr %s1309, 24
        %s1311 = scalar_lea.vmem [#allocation8], %s1310
        // Predicated region
        $region57: #{tpu_custom_call.1} parent=51 // pred_check
          %p1312 = pneg %p216
        $region58: #{tpu_custom_call.1} parent=51 // pred_check_branch
          %1314 = sbr.rel (%p1312) target = $region60
        $region59: #{tpu_custom_call.1} parent=51 // pred_region
          %s1316 = ssub.s32 384, 384
          %1317 = vsyncadd %s1308, %s1316
          %s1318 = smul.addr %s25, 3
          %s1319 = smul.addr %s1318, 128
          %s1320 = scalar_lea.hbm %s8, %s1319
          %s1322 = sshll.u32 %s1311, 4
          %s1323 = int_to_ptr.vmem [resolvable:$true] %s1322
          %1325 = dma.vmem_to_hbm [thread:$0]  %s1323, 384, %s1320, %s1308
        $region60: #{tpu_custom_call.1} parent=51 // pred_fallthru
          _
      $region52: #{tpu_custom_call.1} parent=5 // pred_fallthru
        _
      %p1326 = scmp.le.s32.totalorder 2, %s20
      // Predicated region
      $region61: #{tpu_custom_call.1} parent=5 // pred_check
        %p1327 = pneg %p1326
      $region62: #{tpu_custom_call.1} parent=5 // pred_check_branch
        %1329 = sbr.rel (%p1327) target = $region64
      $region63: #{tpu_custom_call.1} parent=5 // pred_region
        %s1330 = ssub.s32 %s20, 2
        // Predicated region
        $region65: #{tpu_custom_call.1} parent=63 // pred_check
          %p1331 = pneg %p222
        $region66: #{tpu_custom_call.1} parent=63 // pred_check_branch
          %1333 = sbr.rel (%p1331) target = $region68
        $region67: #{tpu_custom_call.1} parent=63 // pred_region
          %s1334 = sand.u32 %s207, 1
          %s1335 = scalar_lea.sflag [#allocation7], %s1334
          %s1336 = sand.u32 %s207, 1
          %s1337 = smul.addr %s1336, 24
          %s1338 = scalar_lea.vmem [#allocation8], %s1337
          %1339 = dma.done %s1335, 384
        $region68: #{tpu_custom_call.1} parent=63 // pred_fallthru
          _
      $region64: #{tpu_custom_call.1} parent=5 // pred_fallthru
        _
    $region6: #{tpu_custom_call.1} parent=1 // loop_footer
      %s24 = sadd.s32 1, %s20
    $region7: #{tpu_custom_call.1} parent=1 // loop_footer_branch
      %19 = sbr.rel target = $region3
    $region8: #{tpu_custom_call.1} parent=1 // loop_exit
      _
    %1340 = vsyncpa [#allocation6], 1
    %s1341 = scalar_lea.sflag [#allocation6], 1
    %1342 = vsyncpa %s1341, 1
    %1343 = vsyncpa [#allocation7], 1
    %s1344 = scalar_lea.sflag [#allocation7], 1
    %1345 = vsyncpa %s1344, 1

</llo_original>
